<compile_context>
chip_gen: v7x
topology: tpu7x:2x2x1
jax: 0.10.0
libtpu: 0.0.40
codegen_flags: <defaults>
</compile_context>

<pallas_src>
import functools

import jax
import jax.numpy as jnp
from jax.experimental import pallas as pl
from jax.experimental.pallas import tpu as pltpu


def _qconv_kernel(x_ref, w_ref, b_ref, o_ref, xflat_ref, *,
                  h, wd, wp, fh, fw, stride, oh, ow, pad, slab_len, scale):
    """Fixed-point conv for one image / one FN tile.

    x_ref:     (1, C, H, W)        float32 activations (unpadded, NCHW)
    w_ref:     (FH*FW, TFN, C)     integer-valued float32 fixed-point weights
    b_ref:     (TFN, 1)            integer-valued float32 fixed-point bias
    o_ref:     (1, TFN, OH*OW)     output block (spatial on the lane dim)
    xflat_ref: (C, Hp*Wp)          VMEM scratch: zero-padded image, flattened
    """
    # ---- fused zero padding: build the padded image (flattened) in VMEM -----
    if pad > 0:
        xflat_ref[...] = jnp.zeros_like(xflat_ref)
    for r in range(h):                         # static unroll over image rows
        start = (pad + r) * wp + pad
        xflat_ref[:, start:start + wd] = x_ref[0, :, r, :]

    # ---- shifted-slab conv ---------------------------------------------------
    # For tap (kh, kw) the contribution to "wide" output index m = i*Wp + j is
    # x_pad_flat[c, kh*Wp + kw + stride*m]; i.e. one (strided) slice per tap.
    tfn = w_ref.shape[1]
    acc = jnp.zeros((tfn, slab_len), dtype=jnp.float32)
    for kh in range(fh):
        for kw in range(fw):
            off = kh * wp + kw
            if stride == 1:
                slab = xflat_ref[:, off:off + slab_len]              # (C, L)
            else:
                slab = xflat_ref[:, pl.ds(off, slab_len, stride=stride)]
            # TODO(synk): when C % 8 == 0, concatenate the taps' slabs along the
            # contraction dim and issue a single (TFN, FH*FW*C) x (FH*FW*C, L)
            # MXU matmul instead of FH*FW small-K matmuls.
            acc = acc + jnp.dot(w_ref[kh * fw + kw], slab,
                                preferred_element_type=jnp.float32)

    out = (acc * scale + b_ref[...]).astype(o_ref.dtype)             # (TFN, L)

    # ---- compact wide rows (width Wp in m-space) to dense rows of width OW ---
    # so the HBM-visible output is (N, FN, OH*OW): lane-dense, no transpose.
    for i in range(oh):                        # static unroll over output rows
        o_ref[0, :, i * ow:(i + 1) * ow] = out[:, i * wp:i * wp + ow]


def qconv2d(x, W, b=None, stride=1, padding=0, bits=8):
    """Pallas equivalent of QConv2d.forward.

    x: (N, C, H, W) float32, W: (FN, C, FH, FW) float32, b: (FN,) float32 or None.
    Returns (N, FN, OH, OW) with OH = (H + 2*padding - FH)//stride + 1.
    """
    x = x.astype(jnp.float32)
    N, C, H, Wd = x.shape
    FN, FC, FH, FW = W.shape
    assert FC == C and FH == FW, "reference module only supports square filters"

    scale_pow = float(2.0 ** (bits - 1))
    w_fix = jnp.round(W * scale_pow).astype(jnp.float32)            # to_fix_point(W)
    if b is None:
        b_fix = jnp.zeros((FN,), dtype=jnp.float32)                 # torch.zeros path
    else:
        b_fix = jnp.round(b * scale_pow).astype(jnp.float32)        # to_fix_point(b)

    Hp, Wp = H + 2 * padding, Wd + 2 * padding
    OH = (Hp - FH) // stride + 1
    OW = (Wp - FW) // stride + 1
    assert OH == OW, "reference module's out[i, j] indexing requires square output"

    # Weights as (FH*FW, FN, C): per-tap (FN, C) matrices with taps on the
    # major dim (cheap integer-indexed slices in the kernel).
    w3 = jnp.transpose(w_fix, (2, 3, 0, 1)).reshape(FH * FW, FN, C)
    b2 = b_fix.reshape(FN, 1)

    # FN tiling (only when it divides evenly; toy FN=8 -> one tile).
    TFN = 128 if (FN > 128 and FN % 128 == 0) else FN
    n_f = pl.cdiv(FN, TFN)
    slab_len = (OH - 1) * Wp + OW            # length of the "wide" output rows

    kernel = functools.partial(
        _qconv_kernel, h=H, wd=Wd, wp=Wp, fh=FH, fw=FW, stride=stride,
        oh=OH, ow=OW, pad=padding, slab_len=slab_len, scale=1.0 / scale_pow)

    # Explicit scoped-VMEM budget (double-buffered in/out blocks + scratch).
    vmem_bytes = 4 * (2 * C * H * Wd + 2 * FH * FW * TFN * C + 2 * TFN
                      + 2 * TFN * OH * OW + C * Hp * Wp)
    vmem_limit = int(min(max(2 * vmem_bytes, 32 * 1024 * 1024), 64 * 1024 * 1024))

    out_flat = pl.pallas_call(
        kernel,
        out_shape=jax.ShapeDtypeStruct((N, FN, OH * OW), jnp.float32),
        grid_spec=pltpu.PrefetchScalarGridSpec(
            num_scalar_prefetch=0,
            # TODO(synk): for large images also tile output rows (with an input
            # halo) so blocks stay within v7x's 64 MiB VMEM and both TCs get
            # enough parallel blocks.
            grid=(N, n_f),
            in_specs=[
                pl.BlockSpec((1, C, H, Wd), lambda n, f: (n, 0, 0, 0)),
                pl.BlockSpec((FH * FW, TFN, C), lambda n, f: (0, f, 0)),
                pl.BlockSpec((TFN, 1), lambda n, f: (f, 0)),
            ],
            out_specs=pl.BlockSpec((1, TFN, OH * OW), lambda n, f: (n, f, 0)),
            scratch_shapes=[pltpu.VMEM((C, Hp * Wp), jnp.float32)],
        ),
        compiler_params=pltpu.CompilerParams(
            dimension_semantics=("parallel", "parallel"),
            vmem_limit_bytes=vmem_limit),
    )(x, w3, b2)

    # Lane-dense kernel output -> NCHW with a free reshape (no transpose pass).
    return out_flat.reshape(N, FN, OH, OW)


def _reference(x, W, b, stride, padding, bits):
    """Pure-JAX reference with identical semantics (verification only)."""
    scale_pow = float(2.0 ** (bits - 1))
    w_fix = jnp.round(W * scale_pow).astype(jnp.float32)
    b_fix = (jnp.zeros((W.shape[0],), x.dtype) if b is None
             else jnp.round(b * scale_pow).astype(jnp.float32))
    x_pad = jnp.pad(x, ((0, 0), (0, 0), (padding, padding), (padding, padding)))
    out = jax.lax.conv_general_dilated(
        x_pad, w_fix, window_strides=(stride, stride), padding="VALID",
        dimension_numbers=("NCHW", "OIHW", "NCHW"))
    return out / scale_pow + b_fix[None, :, None, None]


if __name__ == "__main__":
    key = jax.random.PRNGKey(0)
    kx, kw, kb = jax.random.split(key, 3)
    # Small shapes consistent with the module: N=2, C=4, H=W=16, FN=8, 3x3 filter.
    x = jax.random.normal(kx, (2, 4, 16, 16), dtype=jnp.float32)
    W = jax.random.normal(kw, (8, 4, 3, 3), dtype=jnp.float32) * 0.1
    b = jax.random.normal(kb, (8,), dtype=jnp.float32) * 0.1

    out = qconv2d(x, W, b, stride=1, padding=1, bits=8)
    out = jax.block_until_ready(out)

    ref = _reference(x, W, b, stride=1, padding=1, bits=8)
    assert out.shape == (2, 8, 16, 16), out.shape
    assert jnp.allclose(out, ref, rtol=1e-4, atol=1e-3), float(jnp.max(jnp.abs(out - ref)))
    print("KERNEL_OK")
</pallas_src>

<mosaic_0001>
module attributes {stable_mosaic.version = 11 : i64} {
  func.func @_qconv_kernel(%arg0: i32, %arg1: i32, %arg2: memref<1x4x16x16xf32, #tpu.memory_space<vmem>>, %arg3: memref<9x8x4xf32, #tpu.memory_space<vmem>>, %arg4: memref<8x1xf32, #tpu.memory_space<vmem>>, %arg5: memref<1x8x256xf32, #tpu.memory_space<vmem>>, %arg6: memref<4x324xf32, #tpu.memory_space<vmem>>) attributes {dimension_semantics = [#tpu.dimension_semantics<parallel>, #tpu.dimension_semantics<parallel>], iteration_bounds = array<i64: 2, 1>, scalar_prefetch = 0 : i64, scratch_operands = 1 : i64, tpu.core_type = #tpu.core_type<tc>, window_params = [{transform_indices = @transform_0, window_bounds = array<i64: 1, 4, 16, 16>}, {transform_indices = @transform_1, window_bounds = array<i64: 9, 8, 4>}, {transform_indices = @transform_2, window_bounds = array<i64: 8, 1>}, {transform_indices = @transform_3, window_bounds = array<i64: 1, 8, 256>}]} {
    %cst = arith.constant 0.000000e+00 : f32
    %0 = vector.broadcast %cst : f32 to vector<4x324xf32>
    %c0 = arith.constant 0 : index
    %c0_0 = arith.constant 0 : index
    %1 = vector.load %arg6[%c0, %c0_0] : memref<4x324xf32, #tpu.memory_space<vmem>>, vector<4x324xf32>
    tpu.vector_store %arg6[%c0, %c0_0], %0 {strides = array<i32>} : memref<4x324xf32, #tpu.memory_space<vmem>>, vector<4x324xf32>,
    %c0_1 = arith.constant 0 : index
    %c0_2 = arith.constant 0 : index
    %c0_3 = arith.constant 0 : index
    %c0_4 = arith.constant 0 : index
    %2 = vector.load %arg2[%c0_1, %c0_2, %c0_3, %c0_4] : memref<1x4x16x16xf32, #tpu.memory_space<vmem>>, vector<1x4x1x16xf32>
    %3 = vector.shape_cast %2 : vector<1x4x1x16xf32> to vector<4x16xf32>
    %c0_5 = arith.constant 0 : index
    %c19 = arith.constant 19 : index
    %4 = vector.load %arg6[%c0_5, %c19] : memref<4x324xf32, #tpu.memory_space<vmem>>, vector<4x16xf32>
    tpu.vector_store %arg6[%c0_5, %c19], %3 {strides = array<i32>} : memref<4x324xf32, #tpu.memory_space<vmem>>, vector<4x16xf32>,
    %c0_6 = arith.constant 0 : index
    %c0_7 = arith.constant 0 : index
    %c1 = arith.constant 1 : index
    %c0_8 = arith.constant 0 : index
    %5 = vector.load %arg2[%c0_6, %c0_7, %c1, %c0_8] : memref<1x4x16x16xf32, #tpu.memory_space<vmem>>, vector<1x4x1x16xf32>
    %6 = vector.shape_cast %5 : vector<1x4x1x16xf32> to vector<4x16xf32>
    %c0_9 = arith.constant 0 : index
    %c37 = arith.constant 37 : index
    %7 = vector.load %arg6[%c0_9, %c37] : memref<4x324xf32, #tpu.memory_space<vmem>>, vector<4x16xf32>
    tpu.vector_store %arg6[%c0_9, %c37], %6 {strides = array<i32>} : memref<4x324xf32, #tpu.memory_space<vmem>>, vector<4x16xf32>,
    %c0_10 = arith.constant 0 : index
    %c0_11 = arith.constant 0 : index
    %c2 = arith.constant 2 : index
    %c0_12 = arith.constant 0 : index
    %8 = vector.load %arg2[%c0_10, %c0_11, %c2, %c0_12] : memref<1x4x16x16xf32, #tpu.memory_space<vmem>>, vector<1x4x1x16xf32>
    %9 = vector.shape_cast %8 : vector<1x4x1x16xf32> to vector<4x16xf32>
    %c0_13 = arith.constant 0 : index
    %c55 = arith.constant 55 : index
    %10 = vector.load %arg6[%c0_13, %c55] : memref<4x324xf32, #tpu.memory_space<vmem>>, vector<4x16xf32>
    tpu.vector_store %arg6[%c0_13, %c55], %9 {strides = array<i32>} : memref<4x324xf32, #tpu.memory_space<vmem>>, vector<4x16xf32>,
    %c0_14 = arith.constant 0 : index
    %c0_15 = arith.constant 0 : index
    %c3 = arith.constant 3 : index
    %c0_16 = arith.constant 0 : index
    %11 = vector.load %arg2[%c0_14, %c0_15, %c3, %c0_16] : memref<1x4x16x16xf32, #tpu.memory_space<vmem>>, vector<1x4x1x16xf32>
    %12 = vector.shape_cast %11 : vector<1x4x1x16xf32> to vector<4x16xf32>
    %c0_17 = arith.constant 0 : index
    %c73 = arith.constant 73 : index
    %13 = vector.load %arg6[%c0_17, %c73] : memref<4x324xf32, #tpu.memory_space<vmem>>, vector<4x16xf32>
    tpu.vector_store %arg6[%c0_17, %c73], %12 {strides = array<i32>} : memref<4x324xf32, #tpu.memory_space<vmem>>, vector<4x16xf32>,
    %c0_18 = arith.constant 0 : index
    %c0_19 = arith.constant 0 : index
    %c4 = arith.constant 4 : index
    %c0_20 = arith.constant 0 : index
    %14 = vector.load %arg2[%c0_18, %c0_19, %c4, %c0_20] : memref<1x4x16x16xf32, #tpu.memory_space<vmem>>, vector<1x4x1x16xf32>
    %15 = vector.shape_cast %14 : vector<1x4x1x16xf32> to vector<4x16xf32>
    %c0_21 = arith.constant 0 : index
    %c91 = arith.constant 91 : index
    %16 = vector.load %arg6[%c0_21, %c91] : memref<4x324xf32, #tpu.memory_space<vmem>>, vector<4x16xf32>
    tpu.vector_store %arg6[%c0_21, %c91], %15 {strides = array<i32>} : memref<4x324xf32, #tpu.memory_space<vmem>>, vector<4x16xf32>,
    %c0_22 = arith.constant 0 : index
    %c0_23 = arith.constant 0 : index
    %c5 = arith.constant 5 : index
    %c0_24 = arith.constant 0 : index
    %17 = vector.load %arg2[%c0_22, %c0_23, %c5, %c0_24] : memref<1x4x16x16xf32, #tpu.memory_space<vmem>>, vector<1x4x1x16xf32>
    %18 = vector.shape_cast %17 : vector<1x4x1x16xf32> to vector<4x16xf32>
    %c0_25 = arith.constant 0 : index
    %c109 = arith.constant 109 : index
    %19 = vector.load %arg6[%c0_25, %c109] : memref<4x324xf32, #tpu.memory_space<vmem>>, vector<4x16xf32>
    tpu.vector_store %arg6[%c0_25, %c109], %18 {strides = array<i32>} : memref<4x324xf32, #tpu.memory_space<vmem>>, vector<4x16xf32>,
    %c0_26 = arith.constant 0 : index
    %c0_27 = arith.constant 0 : index
    %c6 = arith.constant 6 : index
    %c0_28 = arith.constant 0 : index
    %20 = vector.load %arg2[%c0_26, %c0_27, %c6, %c0_28] : memref<1x4x16x16xf32, #tpu.memory_space<vmem>>, vector<1x4x1x16xf32>
    %21 = vector.shape_cast %20 : vector<1x4x1x16xf32> to vector<4x16xf32>
    %c0_29 = arith.constant 0 : index
    %c127 = arith.constant 127 : index
    %22 = vector.load %arg6[%c0_29, %c127] : memref<4x324xf32, #tpu.memory_space<vmem>>, vector<4x16xf32>
    tpu.vector_store %arg6[%c0_29, %c127], %21 {strides = array<i32>} : memref<4x324xf32, #tpu.memory_space<vmem>>, vector<4x16xf32>,
    %c0_30 = arith.constant 0 : index
    %c0_31 = arith.constant 0 : index
    %c7 = arith.constant 7 : index
    %c0_32 = arith.constant 0 : index
    %23 = vector.load %arg2[%c0_30, %c0_31, %c7, %c0_32] : memref<1x4x16x16xf32, #tpu.memory_space<vmem>>, vector<1x4x1x16xf32>
    %24 = vector.shape_cast %23 : vector<1x4x1x16xf32> to vector<4x16xf32>
    %c0_33 = arith.constant 0 : index
    %c145 = arith.constant 145 : index
    %25 = vector.load %arg6[%c0_33, %c145] : memref<4x324xf32, #tpu.memory_space<vmem>>, vector<4x16xf32>
    tpu.vector_store %arg6[%c0_33, %c145], %24 {strides = array<i32>} : memref<4x324xf32, #tpu.memory_space<vmem>>, vector<4x16xf32>,
    %c0_34 = arith.constant 0 : index
    %c0_35 = arith.constant 0 : index
    %c8 = arith.constant 8 : index
    %c0_36 = arith.constant 0 : index
    %26 = vector.load %arg2[%c0_34, %c0_35, %c8, %c0_36] : memref<1x4x16x16xf32, #tpu.memory_space<vmem>>, vector<1x4x1x16xf32>
    %27 = vector.shape_cast %26 : vector<1x4x1x16xf32> to vector<4x16xf32>
    %c0_37 = arith.constant 0 : index
    %c163 = arith.constant 163 : index
    %28 = vector.load %arg6[%c0_37, %c163] : memref<4x324xf32, #tpu.memory_space<vmem>>, vector<4x16xf32>
    tpu.vector_store %arg6[%c0_37, %c163], %27 {strides = array<i32>} : memref<4x324xf32, #tpu.memory_space<vmem>>, vector<4x16xf32>,
    %c0_38 = arith.constant 0 : index
    %c0_39 = arith.constant 0 : index
    %c9 = arith.constant 9 : index
    %c0_40 = arith.constant 0 : index
    %29 = vector.load %arg2[%c0_38, %c0_39, %c9, %c0_40] : memref<1x4x16x16xf32, #tpu.memory_space<vmem>>, vector<1x4x1x16xf32>
    %30 = vector.shape_cast %29 : vector<1x4x1x16xf32> to vector<4x16xf32>
    %c0_41 = arith.constant 0 : index
    %c181 = arith.constant 181 : index
    %31 = vector.load %arg6[%c0_41, %c181] : memref<4x324xf32, #tpu.memory_space<vmem>>, vector<4x16xf32>
    tpu.vector_store %arg6[%c0_41, %c181], %30 {strides = array<i32>} : memref<4x324xf32, #tpu.memory_space<vmem>>, vector<4x16xf32>,
    %c0_42 = arith.constant 0 : index
    %c0_43 = arith.constant 0 : index
    %c10 = arith.constant 10 : index
    %c0_44 = arith.constant 0 : index
    %32 = vector.load %arg2[%c0_42, %c0_43, %c10, %c0_44] : memref<1x4x16x16xf32, #tpu.memory_space<vmem>>, vector<1x4x1x16xf32>
    %33 = vector.shape_cast %32 : vector<1x4x1x16xf32> to vector<4x16xf32>
    %c0_45 = arith.constant 0 : index
    %c199 = arith.constant 199 : index
    %34 = vector.load %arg6[%c0_45, %c199] : memref<4x324xf32, #tpu.memory_space<vmem>>, vector<4x16xf32>
    tpu.vector_store %arg6[%c0_45, %c199], %33 {strides = array<i32>} : memref<4x324xf32, #tpu.memory_space<vmem>>, vector<4x16xf32>,
    %c0_46 = arith.constant 0 : index
    %c0_47 = arith.constant 0 : index
    %c11 = arith.constant 11 : index
    %c0_48 = arith.constant 0 : index
    %35 = vector.load %arg2[%c0_46, %c0_47, %c11, %c0_48] : memref<1x4x16x16xf32, #tpu.memory_space<vmem>>, vector<1x4x1x16xf32>
    %36 = vector.shape_cast %35 : vector<1x4x1x16xf32> to vector<4x16xf32>
    %c0_49 = arith.constant 0 : index
    %c217 = arith.constant 217 : index
    %37 = vector.load %arg6[%c0_49, %c217] : memref<4x324xf32, #tpu.memory_space<vmem>>, vector<4x16xf32>
    tpu.vector_store %arg6[%c0_49, %c217], %36 {strides = array<i32>} : memref<4x324xf32, #tpu.memory_space<vmem>>, vector<4x16xf32>,
    %c0_50 = arith.constant 0 : index
    %c0_51 = arith.constant 0 : index
    %c12 = arith.constant 12 : index
    %c0_52 = arith.constant 0 : index
    %38 = vector.load %arg2[%c0_50, %c0_51, %c12, %c0_52] : memref<1x4x16x16xf32, #tpu.memory_space<vmem>>, vector<1x4x1x16xf32>
    %39 = vector.shape_cast %38 : vector<1x4x1x16xf32> to vector<4x16xf32>
    %c0_53 = arith.constant 0 : index
    %c235 = arith.constant 235 : index
    %40 = vector.load %arg6[%c0_53, %c235] : memref<4x324xf32, #tpu.memory_space<vmem>>, vector<4x16xf32>
    tpu.vector_store %arg6[%c0_53, %c235], %39 {strides = array<i32>} : memref<4x324xf32, #tpu.memory_space<vmem>>, vector<4x16xf32>,
    %c0_54 = arith.constant 0 : index
    %c0_55 = arith.constant 0 : index
    %c13 = arith.constant 13 : index
    %c0_56 = arith.constant 0 : index
    %41 = vector.load %arg2[%c0_54, %c0_55, %c13, %c0_56] : memref<1x4x16x16xf32, #tpu.memory_space<vmem>>, vector<1x4x1x16xf32>
    %42 = vector.shape_cast %41 : vector<1x4x1x16xf32> to vector<4x16xf32>
    %c0_57 = arith.constant 0 : index
    %c253 = arith.constant 253 : index
    %43 = vector.load %arg6[%c0_57, %c253] : memref<4x324xf32, #tpu.memory_space<vmem>>, vector<4x16xf32>
    tpu.vector_store %arg6[%c0_57, %c253], %42 {strides = array<i32>} : memref<4x324xf32, #tpu.memory_space<vmem>>, vector<4x16xf32>,
    %c0_58 = arith.constant 0 : index
    %c0_59 = arith.constant 0 : index
    %c14 = arith.constant 14 : index
    %c0_60 = arith.constant 0 : index
    %44 = vector.load %arg2[%c0_58, %c0_59, %c14, %c0_60] : memref<1x4x16x16xf32, #tpu.memory_space<vmem>>, vector<1x4x1x16xf32>
    %45 = vector.shape_cast %44 : vector<1x4x1x16xf32> to vector<4x16xf32>
    %c0_61 = arith.constant 0 : index
    %c271 = arith.constant 271 : index
    %46 = vector.load %arg6[%c0_61, %c271] : memref<4x324xf32, #tpu.memory_space<vmem>>, vector<4x16xf32>
    tpu.vector_store %arg6[%c0_61, %c271], %45 {strides = array<i32>} : memref<4x324xf32, #tpu.memory_space<vmem>>, vector<4x16xf32>,
    %c0_62 = arith.constant 0 : index
    %c0_63 = arith.constant 0 : index
    %c15 = arith.constant 15 : index
    %c0_64 = arith.constant 0 : index
    %47 = vector.load %arg2[%c0_62, %c0_63, %c15, %c0_64] : memref<1x4x16x16xf32, #tpu.memory_space<vmem>>, vector<1x4x1x16xf32>
    %48 = vector.shape_cast %47 : vector<1x4x1x16xf32> to vector<4x16xf32>
    %c0_65 = arith.constant 0 : index
    %c289 = arith.constant 289 : index
    %49 = vector.load %arg6[%c0_65, %c289] : memref<4x324xf32, #tpu.memory_space<vmem>>, vector<4x16xf32>
    tpu.vector_store %arg6[%c0_65, %c289], %48 {strides = array<i32>} : memref<4x324xf32, #tpu.memory_space<vmem>>, vector<4x16xf32>,
    %cst_66 = arith.constant 0.000000e+00 : f32
    %50 = vector.broadcast %cst_66 : f32 to vector<8x286xf32>
    %c0_67 = arith.constant 0 : index
    %c0_68 = arith.constant 0 : index
    %51 = vector.load %arg6[%c0_67, %c0_68] : memref<4x324xf32, #tpu.memory_space<vmem>>, vector<4x286xf32>
    %c0_69 = arith.constant 0 : index
    %c0_70 = arith.constant 0 : index
    %c0_71 = arith.constant 0 : index
    %52 = vector.load %arg3[%c0_69, %c0_70, %c0_71] : memref<9x8x4xf32, #tpu.memory_space<vmem>>, vector<1x8x4xf32>
    %53 = vector.shape_cast %52 : vector<1x8x4xf32> to vector<8x4xf32>
    %cst_72 = arith.constant dense<0.000000e+00> : vector<8x286xf32>
    %54 = tpu.matmul %53, %51, %cst_72 {dimension_numbers = #tpu.dot_dimension_numbers<[1], [0], [0], [1], [0, 0, 1, 1], [], []>} : vector<8x4xf32>, vector<4x286xf32>, vector<8x286xf32> -> vector<8x286xf32>
    %55 = arith.addf %50, %54 : vector<8x286xf32>
    %c0_73 = arith.constant 0 : index
    %c1_74 = arith.constant 1 : index
    %56 = vector.load %arg6[%c0_73, %c1_74] : memref<4x324xf32, #tpu.memory_space<vmem>>, vector<4x286xf32>
    %c1_75 = arith.constant 1 : index
    %c0_76 = arith.constant 0 : index
    %c0_77 = arith.constant 0 : index
    %57 = vector.load %arg3[%c1_75, %c0_76, %c0_77] : memref<9x8x4xf32, #tpu.memory_space<vmem>>, vector<1x8x4xf32>
    %58 = vector.shape_cast %57 : vector<1x8x4xf32> to vector<8x4xf32>
    %cst_78 = arith.constant dense<0.000000e+00> : vector<8x286xf32>
    %59 = tpu.matmul %58, %56, %cst_78 {dimension_numbers = #tpu.dot_dimension_numbers<[1], [0], [0], [1], [0, 0, 1, 1], [], []>} : vector<8x4xf32>, vector<4x286xf32>, vector<8x286xf32> -> vector<8x286xf32>
    %60 = arith.addf %55, %59 : vector<8x286xf32>
    %c0_79 = arith.constant 0 : index
    %c2_80 = arith.constant 2 : index
    %61 = vector.load %arg6[%c0_79, %c2_80] : memref<4x324xf32, #tpu.memory_space<vmem>>, vector<4x286xf32>
    %c2_81 = arith.constant 2 : index
    %c0_82 = arith.constant 0 : index
    %c0_83 = arith.constant 0 : index
    %62 = vector.load %arg3[%c2_81, %c0_82, %c0_83] : memref<9x8x4xf32, #tpu.memory_space<vmem>>, vector<1x8x4xf32>
    %63 = vector.shape_cast %62 : vector<1x8x4xf32> to vector<8x4xf32>
    %cst_84 = arith.constant dense<0.000000e+00> : vector<8x286xf32>
    %64 = tpu.matmul %63, %61, %cst_84 {dimension_numbers = #tpu.dot_dimension_numbers<[1], [0], [0], [1], [0, 0, 1, 1], [], []>} : vector<8x4xf32>, vector<4x286xf32>, vector<8x286xf32> -> vector<8x286xf32>
    %65 = arith.addf %60, %64 : vector<8x286xf32>
    %c0_85 = arith.constant 0 : index
    %c18 = arith.constant 18 : index
    %66 = vector.load %arg6[%c0_85, %c18] : memref<4x324xf32, #tpu.memory_space<vmem>>, vector<4x286xf32>
    %c3_86 = arith.constant 3 : index
    %c0_87 = arith.constant 0 : index
    %c0_88 = arith.constant 0 : index
    %67 = vector.load %arg3[%c3_86, %c0_87, %c0_88] : memref<9x8x4xf32, #tpu.memory_space<vmem>>, vector<1x8x4xf32>
    %68 = vector.shape_cast %67 : vector<1x8x4xf32> to vector<8x4xf32>
    %cst_89 = arith.constant dense<0.000000e+00> : vector<8x286xf32>
    %69 = tpu.matmul %68, %66, %cst_89 {dimension_numbers = #tpu.dot_dimension_numbers<[1], [0], [0], [1], [0, 0, 1, 1], [], []>} : vector<8x4xf32>, vector<4x286xf32>, vector<8x286xf32> -> vector<8x286xf32>
    %70 = arith.addf %65, %69 : vector<8x286xf32>
    %c0_90 = arith.constant 0 : index
    %c19_91 = arith.constant 19 : index
    %71 = vector.load %arg6[%c0_90, %c19_91] : memref<4x324xf32, #tpu.memory_space<vmem>>, vector<4x286xf32>
    %c4_92 = arith.constant 4 : index
    %c0_93 = arith.constant 0 : index
    %c0_94 = arith.constant 0 : index
    %72 = vector.load %arg3[%c4_92, %c0_93, %c0_94] : memref<9x8x4xf32, #tpu.memory_space<vmem>>, vector<1x8x4xf32>
    %73 = vector.shape_cast %72 : vector<1x8x4xf32> to vector<8x4xf32>
    %cst_95 = arith.constant dense<0.000000e+00> : vector<8x286xf32>
    %74 = tpu.matmul %73, %71, %cst_95 {dimension_numbers = #tpu.dot_dimension_numbers<[1], [0], [0], [1], [0, 0, 1, 1], [], []>} : vector<8x4xf32>, vector<4x286xf32>, vector<8x286xf32> -> vector<8x286xf32>
    %75 = arith.addf %70, %74 : vector<8x286xf32>
    %c0_96 = arith.constant 0 : index
    %c20 = arith.constant 20 : index
    %76 = vector.load %arg6[%c0_96, %c20] : memref<4x324xf32, #tpu.memory_space<vmem>>, vector<4x286xf32>
    %c5_97 = arith.constant 5 : index
    %c0_98 = arith.constant 0 : index
    %c0_99 = arith.constant 0 : index
    %77 = vector.load %arg3[%c5_97, %c0_98, %c0_99] : memref<9x8x4xf32, #tpu.memory_space<vmem>>, vector<1x8x4xf32>
    %78 = vector.shape_cast %77 : vector<1x8x4xf32> to vector<8x4xf32>
    %cst_100 = arith.constant dense<0.000000e+00> : vector<8x286xf32>
    %79 = tpu.matmul %78, %76, %cst_100 {dimension_numbers = #tpu.dot_dimension_numbers<[1], [0], [0], [1], [0, 0, 1, 1], [], []>} : vector<8x4xf32>, vector<4x286xf32>, vector<8x286xf32> -> vector<8x286xf32>
    %80 = arith.addf %75, %79 : vector<8x286xf32>
    %c0_101 = arith.constant 0 : index
    %c36 = arith.constant 36 : index
    %81 = vector.load %arg6[%c0_101, %c36] : memref<4x324xf32, #tpu.memory_space<vmem>>, vector<4x286xf32>
    %c6_102 = arith.constant 6 : index
    %c0_103 = arith.constant 0 : index
    %c0_104 = arith.constant 0 : index
    %82 = vector.load %arg3[%c6_102, %c0_103, %c0_104] : memref<9x8x4xf32, #tpu.memory_space<vmem>>, vector<1x8x4xf32>
    %83 = vector.shape_cast %82 : vector<1x8x4xf32> to vector<8x4xf32>
    %cst_105 = arith.constant dense<0.000000e+00> : vector<8x286xf32>
    %84 = tpu.matmul %83, %81, %cst_105 {dimension_numbers = #tpu.dot_dimension_numbers<[1], [0], [0], [1], [0, 0, 1, 1], [], []>} : vector<8x4xf32>, vector<4x286xf32>, vector<8x286xf32> -> vector<8x286xf32>
    %85 = arith.addf %80, %84 : vector<8x286xf32>
    %c0_106 = arith.constant 0 : index
    %c37_107 = arith.constant 37 : index
    %86 = vector.load %arg6[%c0_106, %c37_107] : memref<4x324xf32, #tpu.memory_space<vmem>>, vector<4x286xf32>
    %c7_108 = arith.constant 7 : index
    %c0_109 = arith.constant 0 : index
    %c0_110 = arith.constant 0 : index
    %87 = vector.load %arg3[%c7_108, %c0_109, %c0_110] : memref<9x8x4xf32, #tpu.memory_space<vmem>>, vector<1x8x4xf32>
    %88 = vector.shape_cast %87 : vector<1x8x4xf32> to vector<8x4xf32>
    %cst_111 = arith.constant dense<0.000000e+00> : vector<8x286xf32>
    %89 = tpu.matmul %88, %86, %cst_111 {dimension_numbers = #tpu.dot_dimension_numbers<[1], [0], [0], [1], [0, 0, 1, 1], [], []>} : vector<8x4xf32>, vector<4x286xf32>, vector<8x286xf32> -> vector<8x286xf32>
    %90 = arith.addf %85, %89 : vector<8x286xf32>
    %c0_112 = arith.constant 0 : index
    %c38 = arith.constant 38 : index
    %91 = vector.load %arg6[%c0_112, %c38] : memref<4x324xf32, #tpu.memory_space<vmem>>, vector<4x286xf32>
    %c8_113 = arith.constant 8 : index
    %c0_114 = arith.constant 0 : index
    %c0_115 = arith.constant 0 : index
    %92 = vector.load %arg3[%c8_113, %c0_114, %c0_115] : memref<9x8x4xf32, #tpu.memory_space<vmem>>, vector<1x8x4xf32>
    %93 = vector.shape_cast %92 : vector<1x8x4xf32> to vector<8x4xf32>
    %cst_116 = arith.constant dense<0.000000e+00> : vector<8x286xf32>
    %94 = tpu.matmul %93, %91, %cst_116 {dimension_numbers = #tpu.dot_dimension_numbers<[1], [0], [0], [1], [0, 0, 1, 1], [], []>} : vector<8x4xf32>, vector<4x286xf32>, vector<8x286xf32> -> vector<8x286xf32>
    %95 = arith.addf %90, %94 : vector<8x286xf32>
    %cst_117 = arith.constant 7.812500e-03 : f32
    %96 = vector.broadcast %cst_117 : f32 to vector<8x286xf32>
    %97 = arith.mulf %95, %96 : vector<8x286xf32>
    %c0_118 = arith.constant 0 : index
    %c0_119 = arith.constant 0 : index
    %98 = vector.load %arg4[%c0_118, %c0_119] : memref<8x1xf32, #tpu.memory_space<vmem>>, vector<8x1xf32>
    %99 = vector.broadcast %98 : vector<8x1xf32> to vector<8x286xf32>
    %100 = arith.addf %97, %99 : vector<8x286xf32>
    %101 = vector.extract_strided_slice %100 {offsets = [0, 0], sizes = [8, 16], strides = [1, 1]} : vector<8x286xf32> to vector<8x16xf32>
    %c0_120 = arith.constant 0 : index
    %c0_121 = arith.constant 0 : index
    %c0_122 = arith.constant 0 : index
    %102 = vector.load %arg5[%c0_120, %c0_121, %c0_122] : memref<1x8x256xf32, #tpu.memory_space<vmem>>, vector<1x8x16xf32>
    %103 = vector.shape_cast %102 : vector<1x8x16xf32> to vector<8x16xf32>
    %104 = vector.shape_cast %101 : vector<8x16xf32> to vector<1x8x16xf32>
    tpu.vector_store %arg5[%c0_120, %c0_121, %c0_122], %104 {strides = array<i32>} : memref<1x8x256xf32, #tpu.memory_space<vmem>>, vector<1x8x16xf32>,
    %105 = vector.extract_strided_slice %100 {offsets = [0, 18], sizes = [8, 16], strides = [1, 1]} : vector<8x286xf32> to vector<8x16xf32>
    %c0_123 = arith.constant 0 : index
    %c0_124 = arith.constant 0 : index
    %c16 = arith.constant 16 : index
    %106 = vector.load %arg5[%c0_123, %c0_124, %c16] : memref<1x8x256xf32, #tpu.memory_space<vmem>>, vector<1x8x16xf32>
    %107 = vector.shape_cast %106 : vector<1x8x16xf32> to vector<8x16xf32>
    %108 = vector.shape_cast %105 : vector<8x16xf32> to vector<1x8x16xf32>
    tpu.vector_store %arg5[%c0_123, %c0_124, %c16], %108 {strides = array<i32>} : memref<1x8x256xf32, #tpu.memory_space<vmem>>, vector<1x8x16xf32>,
    %109 = vector.extract_strided_slice %100 {offsets = [0, 36], sizes = [8, 16], strides = [1, 1]} : vector<8x286xf32> to vector<8x16xf32>
    %c0_125 = arith.constant 0 : index
    %c0_126 = arith.constant 0 : index
    %c32 = arith.constant 32 : index
    %110 = vector.load %arg5[%c0_125, %c0_126, %c32] : memref<1x8x256xf32, #tpu.memory_space<vmem>>, vector<1x8x16xf32>
    %111 = vector.shape_cast %110 : vector<1x8x16xf32> to vector<8x16xf32>
    %112 = vector.shape_cast %109 : vector<8x16xf32> to vector<1x8x16xf32>
    tpu.vector_store %arg5[%c0_125, %c0_126, %c32], %112 {strides = array<i32>} : memref<1x8x256xf32, #tpu.memory_space<vmem>>, vector<1x8x16xf32>,
    %113 = vector.extract_strided_slice %100 {offsets = [0, 54], sizes = [8, 16], strides = [1, 1]} : vector<8x286xf32> to vector<8x16xf32>
    %c0_127 = arith.constant 0 : index
    %c0_128 = arith.constant 0 : index
    %c48 = arith.constant 48 : index
    %114 = vector.load %arg5[%c0_127, %c0_128, %c48] : memref<1x8x256xf32, #tpu.memory_space<vmem>>, vector<1x8x16xf32>
    %115 = vector.shape_cast %114 : vector<1x8x16xf32> to vector<8x16xf32>
    %116 = vector.shape_cast %113 : vector<8x16xf32> to vector<1x8x16xf32>
    tpu.vector_store %arg5[%c0_127, %c0_128, %c48], %116 {strides = array<i32>} : memref<1x8x256xf32, #tpu.memory_space<vmem>>, vector<1x8x16xf32>,
    %117 = vector.extract_strided_slice %100 {offsets = [0, 72], sizes = [8, 16], strides = [1, 1]} : vector<8x286xf32> to vector<8x16xf32>
    %c0_129 = arith.constant 0 : index
    %c0_130 = arith.constant 0 : index
    %c64 = arith.constant 64 : index
    %118 = vector.load %arg5[%c0_129, %c0_130, %c64] : memref<1x8x256xf32, #tpu.memory_space<vmem>>, vector<1x8x16xf32>
    %119 = vector.shape_cast %118 : vector<1x8x16xf32> to vector<8x16xf32>
    %120 = vector.shape_cast %117 : vector<8x16xf32> to vector<1x8x16xf32>
    tpu.vector_store %arg5[%c0_129, %c0_130, %c64], %120 {strides = array<i32>} : memref<1x8x256xf32, #tpu.memory_space<vmem>>, vector<1x8x16xf32>,
    %121 = vector.extract_strided_slice %100 {offsets = [0, 90], sizes = [8, 16], strides = [1, 1]} : vector<8x286xf32> to vector<8x16xf32>
    %c0_131 = arith.constant 0 : index
    %c0_132 = arith.constant 0 : index
    %c80 = arith.constant 80 : index
    %122 = vector.load %arg5[%c0_131, %c0_132, %c80] : memref<1x8x256xf32, #tpu.memory_space<vmem>>, vector<1x8x16xf32>
    %123 = vector.shape_cast %122 : vector<1x8x16xf32> to vector<8x16xf32>
    %124 = vector.shape_cast %121 : vector<8x16xf32> to vector<1x8x16xf32>
    tpu.vector_store %arg5[%c0_131, %c0_132, %c80], %124 {strides = array<i32>} : memref<1x8x256xf32, #tpu.memory_space<vmem>>, vector<1x8x16xf32>,
    %125 = vector.extract_strided_slice %100 {offsets = [0, 108], sizes = [8, 16], strides = [1, 1]} : vector<8x286xf32> to vector<8x16xf32>
    %c0_133 = arith.constant 0 : index
    %c0_134 = arith.constant 0 : index
    %c96 = arith.constant 96 : index
    %126 = vector.load %arg5[%c0_133, %c0_134, %c96] : memref<1x8x256xf32, #tpu.memory_space<vmem>>, vector<1x8x16xf32>
    %127 = vector.shape_cast %126 : vector<1x8x16xf32> to vector<8x16xf32>
    %128 = vector.shape_cast %125 : vector<8x16xf32> to vector<1x8x16xf32>
    tpu.vector_store %arg5[%c0_133, %c0_134, %c96], %128 {strides = array<i32>} : memref<1x8x256xf32, #tpu.memory_space<vmem>>, vector<1x8x16xf32>,
    %129 = vector.extract_strided_slice %100 {offsets = [0, 126], sizes = [8, 16], strides = [1, 1]} : vector<8x286xf32> to vector<8x16xf32>
    %c0_135 = arith.constant 0 : index
    %c0_136 = arith.constant 0 : index
    %c112 = arith.constant 112 : index
    %130 = vector.load %arg5[%c0_135, %c0_136, %c112] : memref<1x8x256xf32, #tpu.memory_space<vmem>>, vector<1x8x16xf32>
    %131 = vector.shape_cast %130 : vector<1x8x16xf32> to vector<8x16xf32>
    %132 = vector.shape_cast %129 : vector<8x16xf32> to vector<1x8x16xf32>
    tpu.vector_store %arg5[%c0_135, %c0_136, %c112], %132 {strides = array<i32>} : memref<1x8x256xf32, #tpu.memory_space<vmem>>, vector<1x8x16xf32>,
    %133 = vector.extract_strided_slice %100 {offsets = [0, 144], sizes = [8, 16], strides = [1, 1]} : vector<8x286xf32> to vector<8x16xf32>
    %c0_137 = arith.constant 0 : index
    %c0_138 = arith.constant 0 : index
    %c128 = arith.constant 128 : index
    %134 = vector.load %arg5[%c0_137, %c0_138, %c128] : memref<1x8x256xf32, #tpu.memory_space<vmem>>, vector<1x8x16xf32>
    %135 = vector.shape_cast %134 : vector<1x8x16xf32> to vector<8x16xf32>
    %136 = vector.shape_cast %133 : vector<8x16xf32> to vector<1x8x16xf32>
    tpu.vector_store %arg5[%c0_137, %c0_138, %c128], %136 {strides = array<i32>} : memref<1x8x256xf32, #tpu.memory_space<vmem>>, vector<1x8x16xf32>,
    %137 = vector.extract_strided_slice %100 {offsets = [0, 162], sizes = [8, 16], strides = [1, 1]} : vector<8x286xf32> to vector<8x16xf32>
    %c0_139 = arith.constant 0 : index
    %c0_140 = arith.constant 0 : index
    %c144 = arith.constant 144 : index
    %138 = vector.load %arg5[%c0_139, %c0_140, %c144] : memref<1x8x256xf32, #tpu.memory_space<vmem>>, vector<1x8x16xf32>
    %139 = vector.shape_cast %138 : vector<1x8x16xf32> to vector<8x16xf32>
    %140 = vector.shape_cast %137 : vector<8x16xf32> to vector<1x8x16xf32>
    tpu.vector_store %arg5[%c0_139, %c0_140, %c144], %140 {strides = array<i32>} : memref<1x8x256xf32, #tpu.memory_space<vmem>>, vector<1x8x16xf32>,
    %141 = vector.extract_strided_slice %100 {offsets = [0, 180], sizes = [8, 16], strides = [1, 1]} : vector<8x286xf32> to vector<8x16xf32>
    %c0_141 = arith.constant 0 : index
    %c0_142 = arith.constant 0 : index
    %c160 = arith.constant 160 : index
    %142 = vector.load %arg5[%c0_141, %c0_142, %c160] : memref<1x8x256xf32, #tpu.memory_space<vmem>>, vector<1x8x16xf32>
    %143 = vector.shape_cast %142 : vector<1x8x16xf32> to vector<8x16xf32>
    %144 = vector.shape_cast %141 : vector<8x16xf32> to vector<1x8x16xf32>
    tpu.vector_store %arg5[%c0_141, %c0_142, %c160], %144 {strides = array<i32>} : memref<1x8x256xf32, #tpu.memory_space<vmem>>, vector<1x8x16xf32>,
    %145 = vector.extract_strided_slice %100 {offsets = [0, 198], sizes = [8, 16], strides = [1, 1]} : vector<8x286xf32> to vector<8x16xf32>
    %c0_143 = arith.constant 0 : index
    %c0_144 = arith.constant 0 : index
    %c176 = arith.constant 176 : index
    %146 = vector.load %arg5[%c0_143, %c0_144, %c176] : memref<1x8x256xf32, #tpu.memory_space<vmem>>, vector<1x8x16xf32>
    %147 = vector.shape_cast %146 : vector<1x8x16xf32> to vector<8x16xf32>
    %148 = vector.shape_cast %145 : vector<8x16xf32> to vector<1x8x16xf32>
    tpu.vector_store %arg5[%c0_143, %c0_144, %c176], %148 {strides = array<i32>} : memref<1x8x256xf32, #tpu.memory_space<vmem>>, vector<1x8x16xf32>,
    %149 = vector.extract_strided_slice %100 {offsets = [0, 216], sizes = [8, 16], strides = [1, 1]} : vector<8x286xf32> to vector<8x16xf32>
    %c0_145 = arith.constant 0 : index
    %c0_146 = arith.constant 0 : index
    %c192 = arith.constant 192 : index
    %150 = vector.load %arg5[%c0_145, %c0_146, %c192] : memref<1x8x256xf32, #tpu.memory_space<vmem>>, vector<1x8x16xf32>
    %151 = vector.shape_cast %150 : vector<1x8x16xf32> to vector<8x16xf32>
    %152 = vector.shape_cast %149 : vector<8x16xf32> to vector<1x8x16xf32>
    tpu.vector_store %arg5[%c0_145, %c0_146, %c192], %152 {strides = array<i32>} : memref<1x8x256xf32, #tpu.memory_space<vmem>>, vector<1x8x16xf32>,
    %153 = vector.extract_strided_slice %100 {offsets = [0, 234], sizes = [8, 16], strides = [1, 1]} : vector<8x286xf32> to vector<8x16xf32>
    %c0_147 = arith.constant 0 : index
    %c0_148 = arith.constant 0 : index
    %c208 = arith.constant 208 : index
    %154 = vector.load %arg5[%c0_147, %c0_148, %c208] : memref<1x8x256xf32, #tpu.memory_space<vmem>>, vector<1x8x16xf32>
    %155 = vector.shape_cast %154 : vector<1x8x16xf32> to vector<8x16xf32>
    %156 = vector.shape_cast %153 : vector<8x16xf32> to vector<1x8x16xf32>
    tpu.vector_store %arg5[%c0_147, %c0_148, %c208], %156 {strides = array<i32>} : memref<1x8x256xf32, #tpu.memory_space<vmem>>, vector<1x8x16xf32>,
    %157 = vector.extract_strided_slice %100 {offsets = [0, 252], sizes = [8, 16], strides = [1, 1]} : vector<8x286xf32> to vector<8x16xf32>
    %c0_149 = arith.constant 0 : index
    %c0_150 = arith.constant 0 : index
    %c224 = arith.constant 224 : index
    %158 = vector.load %arg5[%c0_149, %c0_150, %c224] : memref<1x8x256xf32, #tpu.memory_space<vmem>>, vector<1x8x16xf32>
    %159 = vector.shape_cast %158 : vector<1x8x16xf32> to vector<8x16xf32>
    %160 = vector.shape_cast %157 : vector<8x16xf32> to vector<1x8x16xf32>
    tpu.vector_store %arg5[%c0_149, %c0_150, %c224], %160 {strides = array<i32>} : memref<1x8x256xf32, #tpu.memory_space<vmem>>, vector<1x8x16xf32>,
    %161 = vector.extract_strided_slice %100 {offsets = [0, 270], sizes = [8, 16], strides = [1, 1]} : vector<8x286xf32> to vector<8x16xf32>
    %c0_151 = arith.constant 0 : index
    %c0_152 = arith.constant 0 : index
    %c240 = arith.constant 240 : index
    %162 = vector.load %arg5[%c0_151, %c0_152, %c240] : memref<1x8x256xf32, #tpu.memory_space<vmem>>, vector<1x8x16xf32>
    %163 = vector.shape_cast %162 : vector<1x8x16xf32> to vector<8x16xf32>
    %164 = vector.shape_cast %161 : vector<8x16xf32> to vector<1x8x16xf32>
    tpu.vector_store %arg5[%c0_151, %c0_152, %c240], %164 {strides = array<i32>} : memref<1x8x256xf32, #tpu.memory_space<vmem>>, vector<1x8x16xf32>,
    return
  }
  func.func @transform_0(%arg0: i32, %arg1: i32) -> (i32, i32, i32, i32) {
    %c0_i32 = arith.constant 0 : i32
    %c0_i32_0 = arith.constant 0 : i32
    %c0_i32_1 = arith.constant 0 : i32
    %c0_i32_2 = arith.constant 0 : i32
    return %arg0, %c0_i32, %c0_i32_0, %c0_i32_1 : i32, i32, i32, i32
  }
  func.func @transform_1(%arg0: i32, %arg1: i32) -> (i32, i32, i32) {
    %c0_i32 = arith.constant 0 : i32
    %c0_i32_0 = arith.constant 0 : i32
    %c0_i32_1 = arith.constant 0 : i32
    return %c0_i32, %arg1, %c0_i32_0 : i32, i32, i32
  }
  func.func @transform_2(%arg0: i32, %arg1: i32) -> (i32, i32) {
    %c0_i32 = arith.constant 0 : i32
    %c0_i32_0 = arith.constant 0 : i32
    return %arg1, %c0_i32 : i32, i32
  }
  func.func @transform_3(%arg0: i32, %arg1: i32) -> (i32, i32, i32) {
    %c0_i32 = arith.constant 0 : i32
    %c0_i32_0 = arith.constant 0 : i32
    return %arg0, %arg1, %c0_i32 : i32, i32, i32
  }
}

</mosaic_0001>

<llo_original>
// kernel: tpu_custom_call.1
$region0: #{tpu_custom_call.1}
  #allocation0 [shape = 'u32[]', space=smem, size = 0x4, offset = 0x4, fixed_abs, tag = 'smem constant byte address 0x4 - core index']
  #allocation1 [shape = 'u32[144,128]{1,0:T(1,128)}', space=vmem, size = 0x12000, scoped, tag = 'internal scratch']
  #allocation2 [shape = 'f32[4,324]{1,0:T(4,128)}', space=vmem, size = 0x1800, scoped, tag = 'scratch operand']
  %s0 = inlined_call_operand.hbm [shape: f32[2,4,16,16], index: 0, kind: input, shape index: {}]
  %s1 = inlined_call_operand.vmem [shape: f32[9,8,4], index: 1, kind: input, shape index: {}]
  %s2 = inlined_call_operand.vmem [shape: f32[8,1], index: 2, kind: input, shape index: {}]
  %s3 = inlined_call_operand.hbm [shape: f32[2,8,256], index: 3, kind: output, shape index: {}]
  %s4 = sld [smem:[#allocation0]]
  $region49: #{tpu_custom_call.1} parent=0
    _
  %s6 = ssub.s32 1, %s4
  %s7 = scalar_select 0, %s6, %s4
  $region1: #{tpu_custom_call.1} parent=0
    #allocation3 [shape = 'u8[65536]{0}', space=vmem, size = 0x10000, scoped, tag = 'input window, operand 0']
    #allocation4 [shape = 's32[2]{0}', space=sflag, size = 0x8, scoped, tag = 'scoped memory for tpu_custom_call.1']
    #allocation5 [shape = 's32[2]{0}', space=sflag, size = 0x8, scoped, tag = 'scoped memory for tpu_custom_call.1']
    #allocation6 [shape = 'u8[16384]{0}', space=vmem, size = 0x4000, scoped, tag = 'output window, operand 0']
    %8 = vsyncpa [#allocation4], 0
    %s9 = scalar_lea.sflag [#allocation4], 1
    %10 = vsyncpa %s9, 0
    %11 = vsyncpa [#allocation5], 0
    %s12 = scalar_lea.sflag [#allocation5], 1
    %13 = vsyncpa %s12, 0
    loop: start=0, step=1, limit=4
    $region2: #{tpu_custom_call.1} parent=1 // loop_pre_header
      _
    $region3: #{tpu_custom_call.1} parent=1 // loop_header
      %s15 = sphi 0, %s19
      %p16 = scmp.ge.s32.totalorder %s15, 4
      %s22 = sphi 0, %s34
      %s23 = sphi 0, %s30
      %s24 = sphi 0, %s22
      %s25 = sphi 0, %s23
      %s26 = sphi 0, %s24
      %s27 = sphi 0, %s25
      %s37 = sphi 0, %s39
      %s40 = sphi 0, %s37
      %s41 = sphi 0, %s40
      %s57 = sphi 0, %s41
      %s63 = sphi 0, %s65
      %s66 = sphi 0, %s63
      %s67 = sphi 0, %s66
      %s83 = sphi 0, %s67
      %s89 = sphi 0, %s91
      %s92 = sphi 0, %s89
      %s93 = sphi 0, %s92
      %s109 = sphi 0, %s93
      %s117 = sphi 0, %s119
      %s120 = sphi 0, %s117
      %s121 = sphi 0, %s120
      %s137 = sphi 0, %s121
    $region4: #{tpu_custom_call.1} parent=1 // loop_header_branch
      %18 = sbr.rel (%p16) target = $region8
    $region5: #{tpu_custom_call.1} parent=1 // loop_body
      %s20 = ssub.s32 %s15, 1
      %s21 = ssub.s32 %s15, 2
      %s28 = sadd.s32 1, %s23
      %p29 = scmp.ge.s32.totalorder %s28, 1
      %s30 = scalar_select %p29, 0, %s28
      %s31 = sadd.s32 1, %s22
      %s32 = scalar_select %p29, %s31, %s22
      %p33 = scmp.ge.s32.totalorder %s32, 2
      %s34 = scalar_select %p33, 0, %s32
      %s35 = ssub.s32 %s22, %s34
      %p36 = scmp.eq.s32.totalorder %s35, 0
      %s38 = sadd.s32 %s37, 1
      %s39 = scalar_select %p36, %s37, %s38
      %p42 = pneg %p36
      %p43 = scmp.eq.s32.totalorder %s15, 1
      %p44 = por %p42, %p43
      %p45 = scmp.ne.s32.totalorder %s37, %s40
      %p46 = scmp.eq.s32.totalorder %s15, 0
      %p47 = por %p45, %p46
      %p48 = scmp.ne.s32.totalorder %s37, %s40
      %p49 = scmp.eq.s32.totalorder %s20, 1
      %p50 = por %p48, %p49
      %p51 = scmp.ne.s32.totalorder %s40, %s41
      %p52 = scmp.eq.s32.totalorder %s20, 0
      %p53 = por %p51, %p52
      %p54 = scmp.ne.s32.totalorder %s40, %s41
      %p55 = scmp.eq.s32.totalorder %s21, 1
      %p56 = por %p54, %p55
      %p58 = scmp.ne.s32.totalorder %s41, %s57
      %p59 = scmp.eq.s32.totalorder %s21, 0
      %p60 = por %p58, %p59
      %s61 = ssub.s32 %s23, %s30
      %p62 = scmp.eq.s32.totalorder %s61, 0
      %s64 = sadd.s32 %s63, 1
      %s65 = scalar_select %p62, %s63, %s64
      %p68 = pneg %p62
      %p69 = scmp.eq.s32.totalorder %s15, 1
      %p70 = por %p68, %p69
      %p71 = scmp.ne.s32.totalorder %s63, %s66
      %p72 = scmp.eq.s32.totalorder %s15, 0
      %p73 = por %p71, %p72
      %p74 = scmp.ne.s32.totalorder %s63, %s66
      %p75 = scmp.eq.s32.totalorder %s20, 1
      %p76 = por %p74, %p75
      %p77 = scmp.ne.s32.totalorder %s66, %s67
      %p78 = scmp.eq.s32.totalorder %s20, 0
      %p79 = por %p77, %p78
      %p80 = scmp.ne.s32.totalorder %s66, %s67
      %p81 = scmp.eq.s32.totalorder %s21, 1
      %p82 = por %p80, %p81
      %p84 = scmp.ne.s32.totalorder %s67, %s83
      %p85 = scmp.eq.s32.totalorder %s21, 0
      %p86 = por %p84, %p85
      %s87 = ssub.s32 %s23, %s30
      %p88 = scmp.eq.s32.totalorder %s87, 0
      %s90 = sadd.s32 %s89, 1
      %s91 = scalar_select %p88, %s89, %s90
      %p94 = pneg %p88
      %p95 = scmp.eq.s32.totalorder %s15, 1
      %p96 = por %p94, %p95
      %p97 = scmp.ne.s32.totalorder %s89, %s92
      %p98 = scmp.eq.s32.totalorder %s15, 0
      %p99 = por %p97, %p98
      %p100 = scmp.ne.s32.totalorder %s89, %s92
      %p101 = scmp.eq.s32.totalorder %s20, 1
      %p102 = por %p100, %p101
      %p103 = scmp.ne.s32.totalorder %s92, %s93
      %p104 = scmp.eq.s32.totalorder %s20, 0
      %p105 = por %p103, %p104
      %p106 = scmp.ne.s32.totalorder %s92, %s93
      %p107 = scmp.eq.s32.totalorder %s21, 1
      %p108 = por %p106, %p107
      %p110 = scmp.ne.s32.totalorder %s93, %s109
      %p111 = scmp.eq.s32.totalorder %s21, 0
      %p112 = por %p110, %p111
      %s113 = ssub.s32 %s22, %s34
      %s114 = ssub.s32 %s23, %s30
      %s115 = sor.u32 %s113, %s114
      %p116 = scmp.eq.s32.totalorder %s115, 0
      %s118 = sadd.s32 %s117, 1
      %s119 = scalar_select %p116, %s117, %s118
      %p122 = pneg %p116
      %p123 = scmp.eq.s32.totalorder %s15, 1
      %p124 = por %p122, %p123
      %p125 = scmp.ne.s32.totalorder %s117, %s120
      %p126 = scmp.eq.s32.totalorder %s15, 0
      %p127 = por %p125, %p126
      %p128 = scmp.ne.s32.totalorder %s117, %s120
      %p129 = scmp.eq.s32.totalorder %s20, 1
      %p130 = por %p128, %p129
      %p131 = scmp.ne.s32.totalorder %s120, %s121
      %p132 = scmp.eq.s32.totalorder %s20, 0
      %p133 = por %p131, %p132
      %p134 = scmp.ne.s32.totalorder %s120, %s121
      %p135 = scmp.eq.s32.totalorder %s21, 1
      %p136 = por %p134, %p135
      %p138 = scmp.ne.s32.totalorder %s121, %s137
      %p139 = scmp.eq.s32.totalorder %s21, 0
      %p140 = por %p138, %p139
      %p141 = scmp.le.s32.totalorder 1, %s15
      %p142 = scmp.lt.s32.totalorder %s15, 3
      %p143 = pnand %p141, %p142
      %p144 = pneg %p143
      // Predicated region
      $region9: #{tpu_custom_call.1} parent=5 // pred_check
        _
      $region10: #{tpu_custom_call.1} parent=5 // pred_check_branch
        %146 = sbr.rel (%p143) target = $region12
      $region11: #{tpu_custom_call.1} parent=5 // pred_region
        %s147 = ssub.s32 %s15, 1
        // Predicated region
        $region13: #{tpu_custom_call.1} parent=11 // pred_check
          %p148 = pneg %p79
        $region14: #{tpu_custom_call.1} parent=11 // pred_check_branch
          %150 = sbr.rel (%p148) target = $region16
        $region15: #{tpu_custom_call.1} parent=11 // pred_region
          %p151 = scmp.lt.s32.totalorder %s25, 0
          %s152 = scalar_select %p151, %s25, 0
          %s153 = smul.addr %s152, 8
          %s154 = scalar_lea.vmem %s1, %s153
        $region16: #{tpu_custom_call.1} parent=11 // pred_fallthru
          _
        // Predicated region
        $region17: #{tpu_custom_call.1} parent=11 // pred_check
          %p155 = pneg %p105
        $region18: #{tpu_custom_call.1} parent=11 // pred_check_branch
          %157 = sbr.rel (%p155) target = $region20
        $region19: #{tpu_custom_call.1} parent=11 // pred_region
          %p158 = scmp.lt.s32.totalorder %s25, 0
          %s159 = scalar_select %p158, %s25, 0
          %s160 = smul.addr %s159, 8
          %s161 = scalar_lea.vmem %s2, %s160
        $region20: #{tpu_custom_call.1} parent=11 // pred_fallthru
          _
      $region12: #{tpu_custom_call.1} parent=5 // pred_fallthru
        _
      %p162 = scmp.lt.s32.totalorder %s15, 2
      // Predicated region
      $region21: #{tpu_custom_call.1} parent=5 // pred_check
        %p163 = pneg %p162
      $region22: #{tpu_custom_call.1} parent=5 // pred_check_branch
        %165 = sbr.rel (%p163) target = $region24
      $region23: #{tpu_custom_call.1} parent=5 // pred_region
        // Predicated region
        $region25: #{tpu_custom_call.1} parent=23 // pred_check
          %p166 = pneg %p47
        $region26: #{tpu_custom_call.1} parent=23 // pred_check_branch
          %168 = sbr.rel (%p166) target = $region28
        $region27: #{tpu_custom_call.1} parent=23 // pred_region
          %s169 = sand.u32 %s37, 1
          %s170 = scalar_lea.sflag [#allocation4], %s169
          %s171 = sand.u32 %s37, 1
          %s172 = smul.addr %s171, 64
          %s173 = scalar_lea.vmem [#allocation3], %s172
          %s175 = ssub.s32 1024, 1024
          %176 = vsyncadd %s170, %s175
          %s177 = smul.addr %s22, 8
          %s178 = smul.addr %s177, 128
          %s179 = scalar_lea.hbm %s0, %s178
          %s180 = sshll.u32 %s173, 4
          %s181 = int_to_ptr.vmem [resolvable:$true] %s180
          %186 = dma.hbm_to_vmem [thread:$0]  %s179, 1024, %s181, %s170, 128, 128, 8
        $region28: #{tpu_custom_call.1} parent=23 // pred_fallthru
          _
      $region24: #{tpu_custom_call.1} parent=5 // pred_fallthru
        _
      %p187 = scmp.le.s32.totalorder 1, %s15
      %p188 = scmp.lt.s32.totalorder %s15, 3
      %p189 = pnand %p187, %p188
      %p190 = pneg %p189
      // Predicated region
      $region29: #{tpu_custom_call.1} parent=5 // pred_check
        _
      $region30: #{tpu_custom_call.1} parent=5 // pred_check_branch
        %192 = sbr.rel (%p189) target = $region32
      $region31: #{tpu_custom_call.1} parent=5 // pred_region
        %s193 = ssub.s32 %s15, 1
        %s194 = sand.u32 %s40, 1
        %s195 = scalar_lea.sflag [#allocation4], %s194
        %s196 = sand.u32 %s40, 1
        %s197 = smul.addr %s196, 64
        %s198 = scalar_lea.vmem [#allocation3], %s197
        // Predicated region
        $region33: #{tpu_custom_call.1} parent=31 // pred_check
          %p199 = pneg %p53
        $region34: #{tpu_custom_call.1} parent=31 // pred_check_branch
          %201 = sbr.rel (%p199) target = $region36
        $region35: #{tpu_custom_call.1} parent=31 // pred_region
          %202 = dma.done %s195, 1024
        $region36: #{tpu_custom_call.1} parent=31 // pred_fallthru
          _
        %s203 = sand.u32 %s40, 1
        %s204 = scalar_lea.sflag [#allocation4], %s203
        %s205 = sand.u32 %s40, 1
        %s206 = smul.addr %s205, 64
        %s207 = scalar_lea.vmem [#allocation3], %s206
        %p208 = pneg %p53
        %p209 = pneg %p50
        %p210 = scmp.lt.s32.totalorder %s25, 0
        %s211 = scalar_select %p210, %s25, 0
        %s212 = smul.addr %s211, 8
        %s213 = scalar_lea.vmem %s1, %s212
        %p214 = pneg %p79
        %p215 = pneg %p76
        %p216 = scmp.lt.s32.totalorder %s25, 0
        %s217 = scalar_select %p216, %s25, 0
        %s218 = smul.addr %s217, 8
        %s219 = scalar_lea.vmem %s2, %s218
        %p220 = pneg %p105
        %p221 = pneg %p102
        %p222 = pneg %p133
        %p223 = pneg %p130
        %s224 = sand.u32 %s120, 1
        %s225 = scalar_lea.sflag [#allocation5], %s224
        %s226 = sand.u32 %s120, 1
        %s227 = smul.addr %s226, 16
        %s228 = scalar_lea.vmem [#allocation6], %s227
        %p229 = scmp.lt.s32.totalorder %s25, 0
        %s230 = scalar_select %p229, %s25, 0
        %s231 = smul.addr %s230, 8
        %s232 = scalar_lea.vmem %s1, %s231
        %p233 = scmp.lt.s32.totalorder %s25, 0
        %s234 = scalar_select %p233, %s25, 0
        %s235 = smul.addr %s234, 8
        %s236 = scalar_lea.vmem %s2, %s235
        %237 = vst [vmem:[#allocation2] sm:$0xff] 0.0
        %vm238 = vcmask 551936
        %239 = vst.msk [vmem:[#allocation2 + $0x8] sm:$0xf] %vm238, 0.0
        %v240 = vld [vmem:[%s198] sm:$0x1]
        %v241 = vld [vmem:[%s198 + $0x10] sm:$0x1]
        %v242 = vld [vmem:[%s198 + $0x20] sm:$0x1]
        %v243 = vld [vmem:[%s198 + $0x30] sm:$0x1]
        %v248 = vrot.slane %v241, 7
        %vm249 = vcmask 1041409
        %v250 = vsel %vm249, %v248, %v240
        %vm251 = vcmask 1045509
        %v252 = vsel %vm251, %v248, %v250
        %v253 = vrot.slane %v242, 6
        %vm254 = vcmask 1042434
        %v255 = vsel %vm254, %v253, %v252
        %vm256 = vcmask 1046534
        %v257 = vsel %vm256, %v253, %v255
        %v258 = vrot.slane %v243, 5
        %vm259 = vcmask 1043459
        %v260 = vsel %vm259, %v258, %v257
        %vm261 = vcmask 1047559
        %v262 = vsel %vm261, %v258, %v260
        %263 = vrot.lane.b32.xlu0 %v262, 19
        %v264 = vpop.permute.xlu0 %263
        %vm266 = vcmask 281752
        %267 = vst.msk [vmem:[#allocation2] sm:$0xf] %vm266, %v264
        %v268 = vld [vmem:[%s198 + $0x1] sm:$0x1]
        %v269 = vld [vmem:[%s198 + $0x11] sm:$0x1]
        %v270 = vld [vmem:[%s198 + $0x21] sm:$0x1]
        %v271 = vld [vmem:[%s198 + $0x31] sm:$0x1]
        %v276 = vrot.slane %v269, 7
        %v277 = vsel %vm249, %v276, %v268
        %v278 = vsel %vm251, %v276, %v277
        %v279 = vrot.slane %v270, 6
        %v280 = vsel %vm254, %v279, %v278
        %v281 = vsel %vm256, %v279, %v280
        %v282 = vrot.slane %v271, 5
        %v283 = vsel %vm259, %v282, %v281
        %v284 = vsel %vm261, %v282, %v283
        %285 = vrot.lane.b32.xlu0 %v284, 37
        %v286 = vpop.permute.xlu0 %285
        %vm288 = vcmask 429352
        %289 = vst.msk [vmem:[#allocation2] sm:$0xf] %vm288, %v286
        %v290 = vld [vmem:[%s198 + $0x2] sm:$0x1]
        %v291 = vld [vmem:[%s198 + $0x12] sm:$0x1]
        %v292 = vld [vmem:[%s198 + $0x22] sm:$0x1]
        %v293 = vld [vmem:[%s198 + $0x32] sm:$0x1]
        %v298 = vrot.slane %v291, 7
        %v299 = vsel %vm249, %v298, %v290
        %v300 = vsel %vm251, %v298, %v299
        %v301 = vrot.slane %v292, 6
        %v302 = vsel %vm254, %v301, %v300
        %v303 = vsel %vm256, %v301, %v302
        %v304 = vrot.slane %v293, 5
        %v305 = vsel %vm259, %v304, %v303
        %v306 = vsel %vm261, %v304, %v305
        %307 = vrot.lane.b32.xlu0 %v306, 55
        %v308 = vpop.permute.xlu0 %307
        %vm310 = vcmask 576952
        %311 = vst.msk [vmem:[#allocation2] sm:$0xf] %vm310, %v308
        %v312 = vld [vmem:[%s198 + $0x3] sm:$0x1]
        %v313 = vld [vmem:[%s198 + $0x13] sm:$0x1]
        %v314 = vld [vmem:[%s198 + $0x23] sm:$0x1]
        %v315 = vld [vmem:[%s198 + $0x33] sm:$0x1]
        %v320 = vrot.slane %v313, 7
        %v321 = vsel %vm249, %v320, %v312
        %v322 = vsel %vm251, %v320, %v321
        %v323 = vrot.slane %v314, 6
        %v324 = vsel %vm254, %v323, %v322
        %v325 = vsel %vm256, %v323, %v324
        %v326 = vrot.slane %v315, 5
        %v327 = vsel %vm259, %v326, %v325
        %v328 = vsel %vm261, %v326, %v327
        %329 = vrot.lane.b32.xlu0 %v328, 73
        %v330 = vpop.permute.xlu0 %329
        %vm332 = vcmask 724552
        %333 = vst.msk [vmem:[#allocation2] sm:$0xf] %vm332, %v330
        %v334 = vld [vmem:[%s198 + $0x4] sm:$0x1]
        %v335 = vld [vmem:[%s198 + $0x14] sm:$0x1]
        %v336 = vld [vmem:[%s198 + $0x24] sm:$0x1]
        %v337 = vld [vmem:[%s198 + $0x34] sm:$0x1]
        %v342 = vrot.slane %v335, 7
        %v343 = vsel %vm249, %v342, %v334
        %v344 = vsel %vm251, %v342, %v343
        %v345 = vrot.slane %v336, 6
        %v346 = vsel %vm254, %v345, %v344
        %v347 = vsel %vm256, %v345, %v346
        %v348 = vrot.slane %v337, 5
        %v349 = vsel %vm259, %v348, %v347
        %v350 = vsel %vm261, %v348, %v349
        %351 = vrot.lane.b32.xlu0 %v350, 91
        %v352 = vpop.permute.xlu0 %351
        %vm354 = vcmask 872152
        %355 = vst.msk [vmem:[#allocation2] sm:$0xf] %vm354, %v352
        %v356 = vld [vmem:[%s198 + $0x5] sm:$0x1]
        %v357 = vld [vmem:[%s198 + $0x15] sm:$0x1]
        %v358 = vld [vmem:[%s198 + $0x25] sm:$0x1]
        %v359 = vld [vmem:[%s198 + $0x35] sm:$0x1]
        %v364 = vrot.slane %v357, 7
        %v365 = vsel %vm249, %v364, %v356
        %v366 = vsel %vm251, %v364, %v365
        %v367 = vrot.slane %v358, 6
        %v368 = vsel %vm254, %v367, %v366
        %v369 = vsel %vm256, %v367, %v368
        %v370 = vrot.slane %v359, 5
        %v371 = vsel %vm259, %v370, %v369
        %v372 = vsel %vm261, %v370, %v371
        %373 = vrot.lane.b32.xlu0 %v372, 109
        %v374 = vpop.permute.xlu0 %373
        %vm376 = vcmask 1019752
        %377 = vst.msk [vmem:[#allocation2] sm:$0xf] %vm376, %v374
        %v378 = vld [vmem:[%s198 + $0x6] sm:$0x1]
        %v379 = vld [vmem:[%s198 + $0x16] sm:$0x1]
        %v380 = vld [vmem:[%s198 + $0x26] sm:$0x1]
        %v381 = vld [vmem:[%s198 + $0x36] sm:$0x1]
        %v386 = vrot.slane %v379, 7
        %v387 = vsel %vm249, %v386, %v378
        %v388 = vsel %vm251, %v386, %v387
        %v389 = vrot.slane %v380, 6
        %v390 = vsel %vm254, %v389, %v388
        %v391 = vsel %vm256, %v389, %v390
        %v392 = vrot.slane %v381, 5
        %v393 = vsel %vm259, %v392, %v391
        %v394 = vsel %vm261, %v392, %v393
        %395 = vrot.lane.b32.xlu0 %v394, 127
        %v396 = vpop.permute.xlu0 %395
        %v397 = vrot.slane %v396, 4
        %vm398 = vcmask 1039360
        %v399 = vsel %vm398, %v397, %v396
        %vm401 = vcmask 1044472
        %vm402 = vcmask 121860
        %vm403 = vmor %vm402, %vm401
        %404 = vst.msk [vmem:[#allocation2] sm:$0xff] %vm403, %v399
        %v405 = vld [vmem:[%s198 + $0x7] sm:$0x1]
        %v406 = vld [vmem:[%s198 + $0x17] sm:$0x1]
        %v407 = vld [vmem:[%s198 + $0x27] sm:$0x1]
        %v408 = vld [vmem:[%s198 + $0x37] sm:$0x1]
        %v413 = vrot.slane %v406, 7
        %v414 = vsel %vm249, %v413, %v405
        %v415 = vsel %vm251, %v413, %v414
        %v416 = vrot.slane %v407, 6
        %v417 = vsel %vm254, %v416, %v415
        %v418 = vsel %vm256, %v416, %v417
        %v419 = vrot.slane %v408, 5
        %v420 = vsel %vm259, %v419, %v418
        %v421 = vsel %vm261, %v419, %v420
        %422 = vrot.lane.b32.xlu0 %v421, 17
        %v423 = vpop.permute.xlu0 %422
        %vm425 = vcmask 265352
        %426 = vst.msk [vmem:[#allocation2 + $0x4] sm:$0xf] %vm425, %v423
        %v427 = vld [vmem:[%s198 + $0x8] sm:$0x1]
        %v428 = vld [vmem:[%s198 + $0x18] sm:$0x1]
        %v429 = vld [vmem:[%s198 + $0x28] sm:$0x1]
        %v430 = vld [vmem:[%s198 + $0x38] sm:$0x1]
        %v435 = vrot.slane %v428, 7
        %v436 = vsel %vm249, %v435, %v427
        %v437 = vsel %vm251, %v435, %v436
        %v438 = vrot.slane %v429, 6
        %v439 = vsel %vm254, %v438, %v437
        %v440 = vsel %vm256, %v438, %v439
        %v441 = vrot.slane %v430, 5
        %v442 = vsel %vm259, %v441, %v440
        %v443 = vsel %vm261, %v441, %v442
        %444 = vrot.lane.b32.xlu0 %v443, 35
        %v445 = vpop.permute.xlu0 %444
        %vm447 = vcmask 412952
        %448 = vst.msk [vmem:[#allocation2 + $0x4] sm:$0xf] %vm447, %v445
        %v449 = vld [vmem:[%s198 + $0x9] sm:$0x1]
        %v450 = vld [vmem:[%s198 + $0x19] sm:$0x1]
        %v451 = vld [vmem:[%s198 + $0x29] sm:$0x1]
        %v452 = vld [vmem:[%s198 + $0x39] sm:$0x1]
        %v457 = vrot.slane %v450, 7
        %v458 = vsel %vm249, %v457, %v449
        %v459 = vsel %vm251, %v457, %v458
        %v460 = vrot.slane %v451, 6
        %v461 = vsel %vm254, %v460, %v459
        %v462 = vsel %vm256, %v460, %v461
        %v463 = vrot.slane %v452, 5
        %v464 = vsel %vm259, %v463, %v462
        %v465 = vsel %vm261, %v463, %v464
        %466 = vrot.lane.b32.xlu0 %v465, 53
        %v467 = vpop.permute.xlu0 %466
        %vm469 = vcmask 560552
        %470 = vst.msk [vmem:[#allocation2 + $0x4] sm:$0xf] %vm469, %v467
        %v471 = vld [vmem:[%s198 + $0xa] sm:$0x1]
        %v472 = vld [vmem:[%s198 + $0x1a] sm:$0x1]
        %v473 = vld [vmem:[%s198 + $0x2a] sm:$0x1]
        %v474 = vld [vmem:[%s198 + $0x3a] sm:$0x1]
        %v479 = vrot.slane %v472, 7
        %v480 = vsel %vm249, %v479, %v471
        %v481 = vsel %vm251, %v479, %v480
        %v482 = vrot.slane %v473, 6
        %v483 = vsel %vm254, %v482, %v481
        %v484 = vsel %vm256, %v482, %v483
        %v485 = vrot.slane %v474, 5
        %v486 = vsel %vm259, %v485, %v484
        %v487 = vsel %vm261, %v485, %v486
        %488 = vrot.lane.b32.xlu0 %v487, 71
        %v489 = vpop.permute.xlu0 %488
        %vm491 = vcmask 708152
        %492 = vst.msk [vmem:[#allocation2 + $0x4] sm:$0xf] %vm491, %v489
        %v493 = vld [vmem:[%s198 + $0xb] sm:$0x1]
        %v494 = vld [vmem:[%s198 + $0x1b] sm:$0x1]
        %v495 = vld [vmem:[%s198 + $0x2b] sm:$0x1]
        %v496 = vld [vmem:[%s198 + $0x3b] sm:$0x1]
        %v501 = vrot.slane %v494, 7
        %v502 = vsel %vm249, %v501, %v493
        %v503 = vsel %vm251, %v501, %v502
        %v504 = vrot.slane %v495, 6
        %v505 = vsel %vm254, %v504, %v503
        %v506 = vsel %vm256, %v504, %v505
        %v507 = vrot.slane %v496, 5
        %v508 = vsel %vm259, %v507, %v506
        %v509 = vsel %vm261, %v507, %v508
        %510 = vrot.lane.b32.xlu0 %v509, 89
        %v511 = vpop.permute.xlu0 %510
        %vm513 = vcmask 855752
        %514 = vst.msk [vmem:[#allocation2 + $0x4] sm:$0xf] %vm513, %v511
        %v515 = vld [vmem:[%s198 + $0xc] sm:$0x1]
        %v516 = vld [vmem:[%s198 + $0x1c] sm:$0x1]
        %v517 = vld [vmem:[%s198 + $0x2c] sm:$0x1]
        %v518 = vld [vmem:[%s198 + $0x3c] sm:$0x1]
        %v523 = vrot.slane %v516, 7
        %v524 = vsel %vm249, %v523, %v515
        %v525 = vsel %vm251, %v523, %v524
        %v526 = vrot.slane %v517, 6
        %v527 = vsel %vm254, %v526, %v525
        %v528 = vsel %vm256, %v526, %v527
        %v529 = vrot.slane %v518, 5
        %v530 = vsel %vm259, %v529, %v528
        %v531 = vsel %vm261, %v529, %v530
        %532 = vrot.lane.b32.xlu0 %v531, 107
        %v533 = vpop.permute.xlu0 %532
        %vm535 = vcmask 1003352
        %536 = vst.msk [vmem:[#allocation2 + $0x4] sm:$0xf] %vm535, %v533
        %v537 = vld [vmem:[%s198 + $0xd] sm:$0x1]
        %v538 = vld [vmem:[%s198 + $0x1d] sm:$0x1]
        %v539 = vld [vmem:[%s198 + $0x2d] sm:$0x1]
        %v540 = vld [vmem:[%s198 + $0x3d] sm:$0x1]
        %v545 = vrot.slane %v538, 7
        %v546 = vsel %vm249, %v545, %v537
        %v547 = vsel %vm251, %v545, %v546
        %v548 = vrot.slane %v539, 6
        %v549 = vsel %vm254, %v548, %v547
        %v550 = vsel %vm256, %v548, %v549
        %v551 = vrot.slane %v540, 5
        %v552 = vsel %vm259, %v551, %v550
        %v553 = vsel %vm261, %v551, %v552
        %554 = vrot.lane.b32.xlu0 %v553, 125
        %v555 = vpop.permute.xlu0 %554
        %v556 = vrot.slane %v555, 4
        %vm557 = vcmask 1022976
        %v558 = vsel %vm557, %v556, %v555
        %vm560 = vcmask 1044456
        %vm561 = vcmask 105476
        %vm562 = vmor %vm561, %vm560
        %563 = vst.msk [vmem:[#allocation2 + $0x4] sm:$0xff] %vm562, %v558
        %v564 = vld [vmem:[%s198 + $0xe] sm:$0x1]
        %v565 = vld [vmem:[%s198 + $0x1e] sm:$0x1]
        %v566 = vld [vmem:[%s198 + $0x2e] sm:$0x1]
        %v567 = vld [vmem:[%s198 + $0x3e] sm:$0x1]
        %v572 = vrot.slane %v565, 7
        %v573 = vsel %vm249, %v572, %v564
        %v574 = vsel %vm251, %v572, %v573
        %v575 = vrot.slane %v566, 6
        %v576 = vsel %vm254, %v575, %v574
        %v577 = vsel %vm256, %v575, %v576
        %v578 = vrot.slane %v567, 5
        %v579 = vsel %vm259, %v578, %v577
        %v580 = vsel %vm261, %v578, %v579
        %581 = vrot.lane.b32.xlu0 %v580, 15
        %v582 = vpop.permute.xlu0 %581
        %vm584 = vcmask 248952
        %585 = vst.msk [vmem:[#allocation2 + $0x8] sm:$0xf] %vm584, %v582
        %v586 = vld [vmem:[%s198 + $0xf] sm:$0x1]
        %v587 = vld [vmem:[%s198 + $0x1f] sm:$0x1]
        %v588 = vld [vmem:[%s198 + $0x2f] sm:$0x1]
        %v589 = vld [vmem:[%s198 + $0x3f] sm:$0x1]
        %v594 = vrot.slane %v587, 7
        %v595 = vsel %vm249, %v594, %v586
        %v596 = vsel %vm251, %v594, %v595
        %v597 = vrot.slane %v588, 6
        %v598 = vsel %vm254, %v597, %v596
        %v599 = vsel %vm256, %v597, %v598
        %v600 = vrot.slane %v589, 5
        %v601 = vsel %vm259, %v600, %v599
        %v602 = vsel %vm261, %v600, %v601
        %603 = vrot.lane.b32.xlu0 %v602, 33
        %v604 = vpop.permute.xlu0 %603
        %vm606 = vcmask 396552
        %607 = vst.msk [vmem:[#allocation2 + $0x8] sm:$0xf] %vm606, %v604
        %v608 = vld [vmem:[#allocation2] sm:$0xff]
        %v609 = vld [vmem:[#allocation2 + $0x8] sm:$0xf]
        %v610 = vld [vmem:[%s232] sm:$0xff]
        %s611 = scalar_lea.vmem %s232, 8
        %v612 = vld [vmem:[%s611] sm:$0xff]
        %v615 = vcombine.high %v608, %v608
        %616 = vrot.lane.b32.xlu0 %v608, 127
        %v617 = vpop.permute.xlu0 %616
        %618 = vrot.lane.b32.xlu0 %v615, 127
        %v619 = vpop.permute.xlu0 %618
        %620 = vrot.lane.b32.xlu0 %v609, 127
        %v621 = vpop.permute.xlu0 %620
        %v622 = vsel %vm398, %v617, %v619
        %v623 = vsel %vm398, %v619, %v621
        %vm624 = vcmask 31744
        %v626 = vsel %vm624, %v612, 0
        %vm628 = vcmask 1043456
        %v629 = vsel %vm628, %v622, 0
        %v631 = vsel %vm628, %v623, 0
        %v633 = vsel %vm628, %v621, 0
        %635 = vmatprep.subr.mxu0 %v631
        %636 = vmatpush1.msra.mxu0 %v629
        %637 = vmatprep.subr.mxu0 0.0
        %638 = vmatpush1.msra.mxu0 0.0
        %639 = vmatprep.subr.mxu0 0.0
        %640 = vmatpush1.msra.mxu0 0.0
        %641 = vmatprep.subr.mxu0 0.0
        %642 = vmatpush1.msra.mxu0 0.0
        %643 = vmatprep.subr.mxu0 0.0
        %644 = vmatpush1.msra.mxu0 0.0
        %645 = vmatprep.subr.mxu0 0.0
        %646 = vmatpush1.msra.mxu0 0.0
        %647 = vmatprep.subr.mxu0 0.0
        %648 = vmatpush1.msra.mxu0 0.0
        %649 = vmatprep.subr.mxu0 0.0
        %650 = vmatpush1.msra.mxu0 0.0
        %651 = vmatprep.subr.mxu0 0.0
        %652 = vmatpush1.msra.mxu0 0.0
        %653 = vmatprep.subr.mxu0 0.0
        %654 = vmatpush1.msra.mxu0 0.0
        %655 = vmatprep.subr.mxu0 0.0
        %656 = vmatpush1.msra.mxu0 0.0
        %657 = vmatprep.subr.mxu0 0.0
        %658 = vmatpush1.msra.mxu0 0.0
        %659 = vmatprep.subr.mxu0 0.0
        %660 = vmatpush1.msra.mxu0 0.0
        %661 = vmatprep.subr.mxu0 0.0
        %662 = vmatpush1.msra.mxu0 0.0
        %663 = vmatprep.subr.mxu0 0.0
        %664 = vmatpush1.msra.mxu0 0.0
        %665 = vmatprep.subr.mxu0 0.0
        %666 = vmatpush1.msra.mxu0 0.0
        %667 = vmatprep.subr.mxu0 0.0
        %668 = vmatpush1.msra.mxu0 0.0
        %669 = vmatprep.subr.mxu0 0.0
        %670 = vmatpush1.msra.mxu0 0.0
        %671 = vmatprep.subr.mxu0 0.0
        %672 = vmatpush1.msra.mxu0 0.0
        %673 = vmatprep.subr.mxu0 0.0
        %674 = vmatpush1.msra.mxu0 0.0
        %675 = vmatprep.subr.mxu0 0.0
        %676 = vmatpush1.msra.mxu0 0.0
        %677 = vmatprep.subr.mxu0 0.0
        %678 = vmatpush1.msra.mxu0 0.0
        %679 = vmatprep.subr.mxu0 0.0
        %680 = vmatpush1.msra.mxu0 0.0
        %681 = vmatprep.subr.mxu0 0.0
        %682 = vmatpush1.msra.mxu0 0.0
        %683 = vmatprep.subr.mxu0 0.0
        %684 = vmatpush1.msra.mxu0 0.0
        %685 = vmatprep.subr.mxu0 0.0
        %686 = vmatpush1.msra.mxu0 0.0
        %687 = vmatprep.subr.mxu0 0.0
        %688 = vmatpush1.msra.mxu0 0.0
        %689 = vmatprep.subr.mxu0 0.0
        %690 = vmatpush1.msra.mxu0 0.0
        %691 = vmatprep.subr.mxu0 0.0
        %692 = vmatpush1.msra.mxu0 0.0
        %693 = vmatprep.subr.mxu0 0.0
        %694 = vmatpush1.msra.mxu0 0.0
        %695 = vmatprep.subr.mxu0 0.0
        %696 = vmatpush1.msra.mxu0 0.0
        %697 = vmatprep.subr.mxu0 0.0
        %698 = vmatpush1.msra.mxu0 0.0
        %699 = vmatprep.mubr.f32.mxu0 0.0
        %700 = vmatmul.mubr.f32.gmra.mrb[0].mxu0 %v626
        %v701 = vpop.f32.mrb[0].mxu0
        %v702 = vadd.f32 0.0, %v701
        %v703 = vpop.f32.mrb[0].mxu0
        %v704 = vadd.f32 0.0, %v703
        %705 = vdwg.mxu0
        %706 = vmatprep.subr.mxu0 0.0
        %707 = vmatpush1.msra.mxu0 %v633
        %708 = vmatprep.subr.mxu0 0.0
        %709 = vmatpush1.msra.mxu0 0.0
        %710 = vmatprep.subr.mxu0 0.0
        %711 = vmatpush1.msra.mxu0 0.0
        %712 = vmatprep.subr.mxu0 0.0
        %713 = vmatpush1.msra.mxu0 0.0
        %714 = vmatprep.subr.mxu0 0.0
        %715 = vmatpush1.msra.mxu0 0.0
        %716 = vmatprep.subr.mxu0 0.0
        %717 = vmatpush1.msra.mxu0 0.0
        %718 = vmatprep.subr.mxu0 0.0
        %719 = vmatpush1.msra.mxu0 0.0
        %720 = vmatprep.subr.mxu0 0.0
        %721 = vmatpush1.msra.mxu0 0.0
        %722 = vmatprep.subr.mxu0 0.0
        %723 = vmatpush1.msra.mxu0 0.0
        %724 = vmatprep.subr.mxu0 0.0
        %725 = vmatpush1.msra.mxu0 0.0
        %726 = vmatprep.subr.mxu0 0.0
        %727 = vmatpush1.msra.mxu0 0.0
        %728 = vmatprep.subr.mxu0 0.0
        %729 = vmatpush1.msra.mxu0 0.0
        %730 = vmatprep.subr.mxu0 0.0
        %731 = vmatpush1.msra.mxu0 0.0
        %732 = vmatprep.subr.mxu0 0.0
        %733 = vmatpush1.msra.mxu0 0.0
        %734 = vmatprep.subr.mxu0 0.0
        %735 = vmatpush1.msra.mxu0 0.0
        %736 = vmatprep.subr.mxu0 0.0
        %737 = vmatpush1.msra.mxu0 0.0
        %738 = vmatprep.subr.mxu0 0.0
        %739 = vmatpush1.msra.mxu0 0.0
        %740 = vmatprep.subr.mxu0 0.0
        %741 = vmatpush1.msra.mxu0 0.0
        %742 = vmatprep.subr.mxu0 0.0
        %743 = vmatpush1.msra.mxu0 0.0
        %744 = vmatprep.subr.mxu0 0.0
        %745 = vmatpush1.msra.mxu0 0.0
        %746 = vmatprep.subr.mxu0 0.0
        %747 = vmatpush1.msra.mxu0 0.0
        %748 = vmatprep.subr.mxu0 0.0
        %749 = vmatpush1.msra.mxu0 0.0
        %750 = vmatprep.subr.mxu0 0.0
        %751 = vmatpush1.msra.mxu0 0.0
        %752 = vmatprep.subr.mxu0 0.0
        %753 = vmatpush1.msra.mxu0 0.0
        %754 = vmatprep.subr.mxu0 0.0
        %755 = vmatpush1.msra.mxu0 0.0
        %756 = vmatprep.subr.mxu0 0.0
        %757 = vmatpush1.msra.mxu0 0.0
        %758 = vmatprep.subr.mxu0 0.0
        %759 = vmatpush1.msra.mxu0 0.0
        %760 = vmatprep.subr.mxu0 0.0
        %761 = vmatpush1.msra.mxu0 0.0
        %762 = vmatprep.subr.mxu0 0.0
        %763 = vmatpush1.msra.mxu0 0.0
        %764 = vmatprep.subr.mxu0 0.0
        %765 = vmatpush1.msra.mxu0 0.0
        %766 = vmatprep.subr.mxu0 0.0
        %767 = vmatpush1.msra.mxu0 0.0
        %768 = vmatprep.subr.mxu0 0.0
        %769 = vmatpush1.msra.mxu0 0.0
        %770 = vmatprep.mubr.f32.mxu0 0.0
        %771 = vmatmul.mubr.f32.gmra.mrb[0].mxu0 %v626
        %v772 = vpop.f32.mrb[0].mxu0
        %v773 = vadd.f32 0.0, %v772
        %v774 = vpop.f32.mrb[0].mxu0
        %775 = vdwg.mxu0
        %v777 = vsel %vm624, %v610, 0
        %v779 = vsel %vm628, %v608, 0
        %v781 = vsel %vm628, %v615, 0
        %v783 = vsel %vm628, %v609, 0
        %785 = vmatprep.subr.mxu0 %v781
        %786 = vmatpush1.msra.mxu0 %v779
        %787 = vmatprep.subr.mxu0 0.0
        %788 = vmatpush1.msra.mxu0 0.0
        %789 = vmatprep.subr.mxu0 0.0
        %790 = vmatpush1.msra.mxu0 0.0
        %791 = vmatprep.subr.mxu0 0.0
        %792 = vmatpush1.msra.mxu0 0.0
        %793 = vmatprep.subr.mxu0 0.0
        %794 = vmatpush1.msra.mxu0 0.0
        %795 = vmatprep.subr.mxu0 0.0
        %796 = vmatpush1.msra.mxu0 0.0
        %797 = vmatprep.subr.mxu0 0.0
        %798 = vmatpush1.msra.mxu0 0.0
        %799 = vmatprep.subr.mxu0 0.0
        %800 = vmatpush1.msra.mxu0 0.0
        %801 = vmatprep.subr.mxu0 0.0
        %802 = vmatpush1.msra.mxu0 0.0
        %803 = vmatprep.subr.mxu0 0.0
        %804 = vmatpush1.msra.mxu0 0.0
        %805 = vmatprep.subr.mxu0 0.0
        %806 = vmatpush1.msra.mxu0 0.0
        %807 = vmatprep.subr.mxu0 0.0
        %808 = vmatpush1.msra.mxu0 0.0
        %809 = vmatprep.subr.mxu0 0.0
        %810 = vmatpush1.msra.mxu0 0.0
        %811 = vmatprep.subr.mxu0 0.0
        %812 = vmatpush1.msra.mxu0 0.0
        %813 = vmatprep.subr.mxu0 0.0
        %814 = vmatpush1.msra.mxu0 0.0
        %815 = vmatprep.subr.mxu0 0.0
        %816 = vmatpush1.msra.mxu0 0.0
        %817 = vmatprep.subr.mxu0 0.0
        %818 = vmatpush1.msra.mxu0 0.0
        %819 = vmatprep.subr.mxu0 0.0
        %820 = vmatpush1.msra.mxu0 0.0
        %821 = vmatprep.subr.mxu0 0.0
        %822 = vmatpush1.msra.mxu0 0.0
        %823 = vmatprep.subr.mxu0 0.0
        %824 = vmatpush1.msra.mxu0 0.0
        %825 = vmatprep.subr.mxu0 0.0
        %826 = vmatpush1.msra.mxu0 0.0
        %827 = vmatprep.subr.mxu0 0.0
        %828 = vmatpush1.msra.mxu0 0.0
        %829 = vmatprep.subr.mxu0 0.0
        %830 = vmatpush1.msra.mxu0 0.0
        %831 = vmatprep.subr.mxu0 0.0
        %832 = vmatpush1.msra.mxu0 0.0
        %833 = vmatprep.subr.mxu0 0.0
        %834 = vmatpush1.msra.mxu0 0.0
        %835 = vmatprep.subr.mxu0 0.0
        %836 = vmatpush1.msra.mxu0 0.0
        %837 = vmatprep.subr.mxu0 0.0
        %838 = vmatpush1.msra.mxu0 0.0
        %839 = vmatprep.subr.mxu0 0.0
        %840 = vmatpush1.msra.mxu0 0.0
        %841 = vmatprep.subr.mxu0 0.0
        %842 = vmatpush1.msra.mxu0 0.0
        %843 = vmatprep.subr.mxu0 0.0
        %844 = vmatpush1.msra.mxu0 0.0
        %845 = vmatprep.subr.mxu0 0.0
        %846 = vmatpush1.msra.mxu0 0.0
        %847 = vmatprep.subr.mxu0 0.0
        %848 = vmatpush1.msra.mxu0 0.0
        %849 = vmatprep.mubr.f32.mxu0 0.0
        %850 = vmatmul.mubr.f32.gmra.mrb[0].mxu0 %v777
        %v851 = vpop.f32.mrb[0].mxu0
        %v852 = vadd.f32 %v702, %v851
        %v853 = vpop.f32.mrb[0].mxu0
        %v854 = vadd.f32 %v704, %v853
        %855 = vdwg.mxu0
        %856 = vmatprep.subr.mxu0 0.0
        %857 = vmatpush1.msra.mxu0 %v783
        %858 = vmatprep.subr.mxu0 0.0
        %859 = vmatpush1.msra.mxu0 0.0
        %860 = vmatprep.subr.mxu0 0.0
        %861 = vmatpush1.msra.mxu0 0.0
        %862 = vmatprep.subr.mxu0 0.0
        %863 = vmatpush1.msra.mxu0 0.0
        %864 = vmatprep.subr.mxu0 0.0
        %865 = vmatpush1.msra.mxu0 0.0
        %866 = vmatprep.subr.mxu0 0.0
        %867 = vmatpush1.msra.mxu0 0.0
        %868 = vmatprep.subr.mxu0 0.0
        %869 = vmatpush1.msra.mxu0 0.0
        %870 = vmatprep.subr.mxu0 0.0
        %871 = vmatpush1.msra.mxu0 0.0
        %872 = vmatprep.subr.mxu0 0.0
        %873 = vmatpush1.msra.mxu0 0.0
        %874 = vmatprep.subr.mxu0 0.0
        %875 = vmatpush1.msra.mxu0 0.0
        %876 = vmatprep.subr.mxu0 0.0
        %877 = vmatpush1.msra.mxu0 0.0
        %878 = vmatprep.subr.mxu0 0.0
        %879 = vmatpush1.msra.mxu0 0.0
        %880 = vmatprep.subr.mxu0 0.0
        %881 = vmatpush1.msra.mxu0 0.0
        %882 = vmatprep.subr.mxu0 0.0
        %883 = vmatpush1.msra.mxu0 0.0
        %884 = vmatprep.subr.mxu0 0.0
        %885 = vmatpush1.msra.mxu0 0.0
        %886 = vmatprep.subr.mxu0 0.0
        %887 = vmatpush1.msra.mxu0 0.0
        %888 = vmatprep.subr.mxu0 0.0
        %889 = vmatpush1.msra.mxu0 0.0
        %890 = vmatprep.subr.mxu0 0.0
        %891 = vmatpush1.msra.mxu0 0.0
        %892 = vmatprep.subr.mxu0 0.0
        %893 = vmatpush1.msra.mxu0 0.0
        %894 = vmatprep.subr.mxu0 0.0
        %895 = vmatpush1.msra.mxu0 0.0
        %896 = vmatprep.subr.mxu0 0.0
        %897 = vmatpush1.msra.mxu0 0.0
        %898 = vmatprep.subr.mxu0 0.0
        %899 = vmatpush1.msra.mxu0 0.0
        %900 = vmatprep.subr.mxu0 0.0
        %901 = vmatpush1.msra.mxu0 0.0
        %902 = vmatprep.subr.mxu0 0.0
        %903 = vmatpush1.msra.mxu0 0.0
        %904 = vmatprep.subr.mxu0 0.0
        %905 = vmatpush1.msra.mxu0 0.0
        %906 = vmatprep.subr.mxu0 0.0
        %907 = vmatpush1.msra.mxu0 0.0
        %908 = vmatprep.subr.mxu0 0.0
        %909 = vmatpush1.msra.mxu0 0.0
        %910 = vmatprep.subr.mxu0 0.0
        %911 = vmatpush1.msra.mxu0 0.0
        %912 = vmatprep.subr.mxu0 0.0
        %913 = vmatpush1.msra.mxu0 0.0
        %914 = vmatprep.subr.mxu0 0.0
        %915 = vmatpush1.msra.mxu0 0.0
        %916 = vmatprep.subr.mxu0 0.0
        %917 = vmatpush1.msra.mxu0 0.0
        %918 = vmatprep.subr.mxu0 0.0
        %919 = vmatpush1.msra.mxu0 0.0
        %920 = vmatprep.mubr.f32.mxu0 0.0
        %921 = vmatmul.mubr.f32.gmra.mrb[0].mxu0 %v777
        %v922 = vpop.f32.mrb[0].mxu0
        %v923 = vadd.f32 %v773, %v922
        %v924 = vpop.f32.mrb[0].mxu0
        %925 = vdwg.mxu0
        %v926 = vld [vmem:[#allocation2] sm:$0xff]
        %v927 = vld [vmem:[#allocation2 + $0x8] sm:$0xf]
        %s928 = scalar_lea.vmem %s232, 16
        %v929 = vld [vmem:[%s928] sm:$0xff]
        %v932 = vcombine.high %v926, %v926
        %933 = vrot.lane.b32.xlu0 %v926, 126
        %v934 = vpop.permute.xlu0 %933
        %935 = vrot.lane.b32.xlu0 %v932, 126
        %v936 = vpop.permute.xlu0 %935
        %937 = vrot.lane.b32.xlu0 %v927, 126
        %v938 = vpop.permute.xlu0 %937
        %vm939 = vcmask 1031168
        %v940 = vsel %vm939, %v934, %v936
        %v941 = vsel %vm939, %v936, %v938
        %v943 = vsel %vm624, %v929, 0
        %v945 = vsel %vm628, %v940, 0
        %v947 = vsel %vm628, %v941, 0
        %v949 = vsel %vm628, %v938, 0
        %951 = vmatprep.subr.mxu0 %v947
        %952 = vmatpush1.msra.mxu0 %v945
        %953 = vmatprep.subr.mxu0 0.0
        %954 = vmatpush1.msra.mxu0 0.0
        %955 = vmatprep.subr.mxu0 0.0
        %956 = vmatpush1.msra.mxu0 0.0
        %957 = vmatprep.subr.mxu0 0.0
        %958 = vmatpush1.msra.mxu0 0.0
        %959 = vmatprep.subr.mxu0 0.0
        %960 = vmatpush1.msra.mxu0 0.0
        %961 = vmatprep.subr.mxu0 0.0
        %962 = vmatpush1.msra.mxu0 0.0
        %963 = vmatprep.subr.mxu0 0.0
        %964 = vmatpush1.msra.mxu0 0.0
        %965 = vmatprep.subr.mxu0 0.0
        %966 = vmatpush1.msra.mxu0 0.0
        %967 = vmatprep.subr.mxu0 0.0
        %968 = vmatpush1.msra.mxu0 0.0
        %969 = vmatprep.subr.mxu0 0.0
        %970 = vmatpush1.msra.mxu0 0.0
        %971 = vmatprep.subr.mxu0 0.0
        %972 = vmatpush1.msra.mxu0 0.0
        %973 = vmatprep.subr.mxu0 0.0
        %974 = vmatpush1.msra.mxu0 0.0
        %975 = vmatprep.subr.mxu0 0.0
        %976 = vmatpush1.msra.mxu0 0.0
        %977 = vmatprep.subr.mxu0 0.0
        %978 = vmatpush1.msra.mxu0 0.0
        %979 = vmatprep.subr.mxu0 0.0
        %980 = vmatpush1.msra.mxu0 0.0
        %981 = vmatprep.subr.mxu0 0.0
        %982 = vmatpush1.msra.mxu0 0.0
        %983 = vmatprep.subr.mxu0 0.0
        %984 = vmatpush1.msra.mxu0 0.0
        %985 = vmatprep.subr.mxu0 0.0
        %986 = vmatpush1.msra.mxu0 0.0
        %987 = vmatprep.subr.mxu0 0.0
        %988 = vmatpush1.msra.mxu0 0.0
        %989 = vmatprep.subr.mxu0 0.0
        %990 = vmatpush1.msra.mxu0 0.0
        %991 = vmatprep.subr.mxu0 0.0
        %992 = vmatpush1.msra.mxu0 0.0
        %993 = vmatprep.subr.mxu0 0.0
        %994 = vmatpush1.msra.mxu0 0.0
        %995 = vmatprep.subr.mxu0 0.0
        %996 = vmatpush1.msra.mxu0 0.0
        %997 = vmatprep.subr.mxu0 0.0
        %998 = vmatpush1.msra.mxu0 0.0
        %999 = vmatprep.subr.mxu0 0.0
        %1000 = vmatpush1.msra.mxu0 0.0
        %1001 = vmatprep.subr.mxu0 0.0
        %1002 = vmatpush1.msra.mxu0 0.0
        %1003 = vmatprep.subr.mxu0 0.0
        %1004 = vmatpush1.msra.mxu0 0.0
        %1005 = vmatprep.subr.mxu0 0.0
        %1006 = vmatpush1.msra.mxu0 0.0
        %1007 = vmatprep.subr.mxu0 0.0
        %1008 = vmatpush1.msra.mxu0 0.0
        %1009 = vmatprep.subr.mxu0 0.0
        %1010 = vmatpush1.msra.mxu0 0.0
        %1011 = vmatprep.subr.mxu0 0.0
        %1012 = vmatpush1.msra.mxu0 0.0
        %1013 = vmatprep.subr.mxu0 0.0
        %1014 = vmatpush1.msra.mxu0 0.0
        %1015 = vmatprep.mubr.f32.mxu0 0.0
        %1016 = vmatmul.mubr.f32.gmra.mrb[0].mxu0 %v943
        %v1017 = vpop.f32.mrb[0].mxu0
        %v1018 = vadd.f32 0.0, %v1017
        %v1019 = vpop.f32.mrb[0].mxu0
        %v1020 = vadd.f32 0.0, %v1019
        %1021 = vdwg.mxu0
        %1022 = vmatprep.subr.mxu0 0.0
        %1023 = vmatpush1.msra.mxu0 %v949
        %1024 = vmatprep.subr.mxu0 0.0
        %1025 = vmatpush1.msra.mxu0 0.0
        %1026 = vmatprep.subr.mxu0 0.0
        %1027 = vmatpush1.msra.mxu0 0.0
        %1028 = vmatprep.subr.mxu0 0.0
        %1029 = vmatpush1.msra.mxu0 0.0
        %1030 = vmatprep.subr.mxu0 0.0
        %1031 = vmatpush1.msra.mxu0 0.0
        %1032 = vmatprep.subr.mxu0 0.0
        %1033 = vmatpush1.msra.mxu0 0.0
        %1034 = vmatprep.subr.mxu0 0.0
        %1035 = vmatpush1.msra.mxu0 0.0
        %1036 = vmatprep.subr.mxu0 0.0
        %1037 = vmatpush1.msra.mxu0 0.0
        %1038 = vmatprep.subr.mxu0 0.0
        %1039 = vmatpush1.msra.mxu0 0.0
        %1040 = vmatprep.subr.mxu0 0.0
        %1041 = vmatpush1.msra.mxu0 0.0
        %1042 = vmatprep.subr.mxu0 0.0
        %1043 = vmatpush1.msra.mxu0 0.0
        %1044 = vmatprep.subr.mxu0 0.0
        %1045 = vmatpush1.msra.mxu0 0.0
        %1046 = vmatprep.subr.mxu0 0.0
        %1047 = vmatpush1.msra.mxu0 0.0
        %1048 = vmatprep.subr.mxu0 0.0
        %1049 = vmatpush1.msra.mxu0 0.0
        %1050 = vmatprep.subr.mxu0 0.0
        %1051 = vmatpush1.msra.mxu0 0.0
        %1052 = vmatprep.subr.mxu0 0.0
        %1053 = vmatpush1.msra.mxu0 0.0
        %1054 = vmatprep.subr.mxu0 0.0
        %1055 = vmatpush1.msra.mxu0 0.0
        %1056 = vmatprep.subr.mxu0 0.0
        %1057 = vmatpush1.msra.mxu0 0.0
        %1058 = vmatprep.subr.mxu0 0.0
        %1059 = vmatpush1.msra.mxu0 0.0
        %1060 = vmatprep.subr.mxu0 0.0
        %1061 = vmatpush1.msra.mxu0 0.0
        %1062 = vmatprep.subr.mxu0 0.0
        %1063 = vmatpush1.msra.mxu0 0.0
        %1064 = vmatprep.subr.mxu0 0.0
        %1065 = vmatpush1.msra.mxu0 0.0
        %1066 = vmatprep.subr.mxu0 0.0
        %1067 = vmatpush1.msra.mxu0 0.0
        %1068 = vmatprep.subr.mxu0 0.0
        %1069 = vmatpush1.msra.mxu0 0.0
        %1070 = vmatprep.subr.mxu0 0.0
        %1071 = vmatpush1.msra.mxu0 0.0
        %1072 = vmatprep.subr.mxu0 0.0
        %1073 = vmatpush1.msra.mxu0 0.0
        %1074 = vmatprep.subr.mxu0 0.0
        %1075 = vmatpush1.msra.mxu0 0.0
        %1076 = vmatprep.subr.mxu0 0.0
        %1077 = vmatpush1.msra.mxu0 0.0
        %1078 = vmatprep.subr.mxu0 0.0
        %1079 = vmatpush1.msra.mxu0 0.0
        %1080 = vmatprep.subr.mxu0 0.0
        %1081 = vmatpush1.msra.mxu0 0.0
        %1082 = vmatprep.subr.mxu0 0.0
        %1083 = vmatpush1.msra.mxu0 0.0
        %1084 = vmatprep.subr.mxu0 0.0
        %1085 = vmatpush1.msra.mxu0 0.0
        %1086 = vmatprep.mubr.f32.mxu0 0.0
        %1087 = vmatmul.mubr.f32.gmra.mrb[0].mxu0 %v943
        %v1088 = vpop.f32.mrb[0].mxu0
        %v1089 = vadd.f32 0.0, %v1088
        %v1090 = vpop.f32.mrb[0].mxu0
        %1091 = vdwg.mxu0
        %v1092 = vadd.f32 %v852, %v1018
        %v1093 = vadd.f32 %v854, %v1020
        %v1094 = vadd.f32 %v923, %v1089
        %v1095 = vld [vmem:[#allocation2] sm:$0xff]
        %v1096 = vld [vmem:[#allocation2 + $0x8] sm:$0xf]
        %s1097 = scalar_lea.vmem %s232, 24
        %v1098 = vld [vmem:[%s1097] sm:$0xff]
        %v1101 = vcombine.high %v1095, %v1095
        %1102 = vrot.lane.b32.xlu0 %v1095, 110
        %v1103 = vpop.permute.xlu0 %1102
        %1104 = vrot.lane.b32.xlu0 %v1101, 110
        %v1105 = vpop.permute.xlu0 %1104
        %1106 = vrot.lane.b32.xlu0 %v1096, 110
        %v1107 = vpop.permute.xlu0 %1106
        %vm1108 = vcmask 900096
        %v1109 = vsel %vm1108, %v1103, %v1105
        %v1110 = vsel %vm1108, %v1105, %v1107
        %v1112 = vsel %vm624, %v1098, 0
        %v1114 = vsel %vm628, %v1109, 0
        %v1116 = vsel %vm628, %v1110, 0
        %v1118 = vsel %vm628, %v1107, 0
        %1120 = vmatprep.subr.mxu0 %v1116
        %1121 = vmatpush1.msra.mxu0 %v1114
        %1122 = vmatprep.subr.mxu0 0.0
        %1123 = vmatpush1.msra.mxu0 0.0
        %1124 = vmatprep.subr.mxu0 0.0
        %1125 = vmatpush1.msra.mxu0 0.0
        %1126 = vmatprep.subr.mxu0 0.0
        %1127 = vmatpush1.msra.mxu0 0.0
        %1128 = vmatprep.subr.mxu0 0.0
        %1129 = vmatpush1.msra.mxu0 0.0
        %1130 = vmatprep.subr.mxu0 0.0
        %1131 = vmatpush1.msra.mxu0 0.0
        %1132 = vmatprep.subr.mxu0 0.0
        %1133 = vmatpush1.msra.mxu0 0.0
        %1134 = vmatprep.subr.mxu0 0.0
        %1135 = vmatpush1.msra.mxu0 0.0
        %1136 = vmatprep.subr.mxu0 0.0
        %1137 = vmatpush1.msra.mxu0 0.0
        %1138 = vmatprep.subr.mxu0 0.0
        %1139 = vmatpush1.msra.mxu0 0.0
        %1140 = vmatprep.subr.mxu0 0.0
        %1141 = vmatpush1.msra.mxu0 0.0
        %1142 = vmatprep.subr.mxu0 0.0
        %1143 = vmatpush1.msra.mxu0 0.0
        %1144 = vmatprep.subr.mxu0 0.0
        %1145 = vmatpush1.msra.mxu0 0.0
        %1146 = vmatprep.subr.mxu0 0.0
        %1147 = vmatpush1.msra.mxu0 0.0
        %1148 = vmatprep.subr.mxu0 0.0
        %1149 = vmatpush1.msra.mxu0 0.0
        %1150 = vmatprep.subr.mxu0 0.0
        %1151 = vmatpush1.msra.mxu0 0.0
        %1152 = vmatprep.subr.mxu0 0.0
        %1153 = vmatpush1.msra.mxu0 0.0
        %1154 = vmatprep.subr.mxu0 0.0
        %1155 = vmatpush1.msra.mxu0 0.0
        %1156 = vmatprep.subr.mxu0 0.0
        %1157 = vmatpush1.msra.mxu0 0.0
        %1158 = vmatprep.subr.mxu0 0.0
        %1159 = vmatpush1.msra.mxu0 0.0
        %1160 = vmatprep.subr.mxu0 0.0
        %1161 = vmatpush1.msra.mxu0 0.0
        %1162 = vmatprep.subr.mxu0 0.0
        %1163 = vmatpush1.msra.mxu0 0.0
        %1164 = vmatprep.subr.mxu0 0.0
        %1165 = vmatpush1.msra.mxu0 0.0
        %1166 = vmatprep.subr.mxu0 0.0
        %1167 = vmatpush1.msra.mxu0 0.0
        %1168 = vmatprep.subr.mxu0 0.0
        %1169 = vmatpush1.msra.mxu0 0.0
        %1170 = vmatprep.subr.mxu0 0.0
        %1171 = vmatpush1.msra.mxu0 0.0
        %1172 = vmatprep.subr.mxu0 0.0
        %1173 = vmatpush1.msra.mxu0 0.0
        %1174 = vmatprep.subr.mxu0 0.0
        %1175 = vmatpush1.msra.mxu0 0.0
        %1176 = vmatprep.subr.mxu0 0.0
        %1177 = vmatpush1.msra.mxu0 0.0
        %1178 = vmatprep.subr.mxu0 0.0
        %1179 = vmatpush1.msra.mxu0 0.0
        %1180 = vmatprep.subr.mxu0 0.0
        %1181 = vmatpush1.msra.mxu0 0.0
        %1182 = vmatprep.subr.mxu0 0.0
        %1183 = vmatpush1.msra.mxu0 0.0
        %1184 = vmatprep.mubr.f32.mxu0 0.0
        %1185 = vmatmul.mubr.f32.gmra.mrb[0].mxu0 %v1112
        %v1186 = vpop.f32.mrb[0].mxu0
        %v1187 = vadd.f32 0.0, %v1186
        %v1188 = vpop.f32.mrb[0].mxu0
        %v1189 = vadd.f32 0.0, %v1188
        %1190 = vdwg.mxu0
        %1191 = vmatprep.subr.mxu0 0.0
        %1192 = vmatpush1.msra.mxu0 %v1118
        %1193 = vmatprep.subr.mxu0 0.0
        %1194 = vmatpush1.msra.mxu0 0.0
        %1195 = vmatprep.subr.mxu0 0.0
        %1196 = vmatpush1.msra.mxu0 0.0
        %1197 = vmatprep.subr.mxu0 0.0
        %1198 = vmatpush1.msra.mxu0 0.0
        %1199 = vmatprep.subr.mxu0 0.0
        %1200 = vmatpush1.msra.mxu0 0.0
        %1201 = vmatprep.subr.mxu0 0.0
        %1202 = vmatpush1.msra.mxu0 0.0
        %1203 = vmatprep.subr.mxu0 0.0
        %1204 = vmatpush1.msra.mxu0 0.0
        %1205 = vmatprep.subr.mxu0 0.0
        %1206 = vmatpush1.msra.mxu0 0.0
        %1207 = vmatprep.subr.mxu0 0.0
        %1208 = vmatpush1.msra.mxu0 0.0
        %1209 = vmatprep.subr.mxu0 0.0
        %1210 = vmatpush1.msra.mxu0 0.0
        %1211 = vmatprep.subr.mxu0 0.0
        %1212 = vmatpush1.msra.mxu0 0.0
        %1213 = vmatprep.subr.mxu0 0.0
        %1214 = vmatpush1.msra.mxu0 0.0
        %1215 = vmatprep.subr.mxu0 0.0
        %1216 = vmatpush1.msra.mxu0 0.0
        %1217 = vmatprep.subr.mxu0 0.0
        %1218 = vmatpush1.msra.mxu0 0.0
        %1219 = vmatprep.subr.mxu0 0.0
        %1220 = vmatpush1.msra.mxu0 0.0
        %1221 = vmatprep.subr.mxu0 0.0
        %1222 = vmatpush1.msra.mxu0 0.0
        %1223 = vmatprep.subr.mxu0 0.0
        %1224 = vmatpush1.msra.mxu0 0.0
        %1225 = vmatprep.subr.mxu0 0.0
        %1226 = vmatpush1.msra.mxu0 0.0
        %1227 = vmatprep.subr.mxu0 0.0
        %1228 = vmatpush1.msra.mxu0 0.0
        %1229 = vmatprep.subr.mxu0 0.0
        %1230 = vmatpush1.msra.mxu0 0.0
        %1231 = vmatprep.subr.mxu0 0.0
        %1232 = vmatpush1.msra.mxu0 0.0
        %1233 = vmatprep.subr.mxu0 0.0
        %1234 = vmatpush1.msra.mxu0 0.0
        %1235 = vmatprep.subr.mxu0 0.0
        %1236 = vmatpush1.msra.mxu0 0.0
        %1237 = vmatprep.subr.mxu0 0.0
        %1238 = vmatpush1.msra.mxu0 0.0
        %1239 = vmatprep.subr.mxu0 0.0
        %1240 = vmatpush1.msra.mxu0 0.0
        %1241 = vmatprep.subr.mxu0 0.0
        %1242 = vmatpush1.msra.mxu0 0.0
        %1243 = vmatprep.subr.mxu0 0.0
        %1244 = vmatpush1.msra.mxu0 0.0
        %1245 = vmatprep.subr.mxu0 0.0
        %1246 = vmatpush1.msra.mxu0 0.0
        %1247 = vmatprep.subr.mxu0 0.0
        %1248 = vmatpush1.msra.mxu0 0.0
        %1249 = vmatprep.subr.mxu0 0.0
        %1250 = vmatpush1.msra.mxu0 0.0
        %1251 = vmatprep.subr.mxu0 0.0
        %1252 = vmatpush1.msra.mxu0 0.0
        %1253 = vmatprep.subr.mxu0 0.0
        %1254 = vmatpush1.msra.mxu0 0.0
        %1255 = vmatprep.mubr.f32.mxu0 0.0
        %1256 = vmatmul.mubr.f32.gmra.mrb[0].mxu0 %v1112
        %v1257 = vpop.f32.mrb[0].mxu0
        %v1258 = vadd.f32 0.0, %v1257
        %v1259 = vpop.f32.mrb[0].mxu0
        %1260 = vdwg.mxu0
        %v1261 = vadd.f32 %v1092, %v1187
        %v1262 = vadd.f32 %v1093, %v1189
        %v1263 = vadd.f32 %v1094, %v1258
        %v1264 = vld [vmem:[#allocation2] sm:$0xff]
        %v1265 = vld [vmem:[#allocation2 + $0x8] sm:$0xf]
        %s1266 = scalar_lea.vmem %s232, 32
        %v1267 = vld [vmem:[%s1266] sm:$0xff]
        %v1270 = vcombine.high %v1264, %v1264
        %1271 = vrot.lane.b32.xlu0 %v1264, 109
        %v1272 = vpop.permute.xlu0 %1271
        %1273 = vrot.lane.b32.xlu0 %v1270, 109
        %v1274 = vpop.permute.xlu0 %1273
        %1275 = vrot.lane.b32.xlu0 %v1265, 109
        %v1276 = vpop.permute.xlu0 %1275
        %vm1277 = vcmask 891904
        %v1278 = vsel %vm1277, %v1272, %v1274
        %v1279 = vsel %vm1277, %v1274, %v1276
        %v1281 = vsel %vm624, %v1267, 0
        %v1283 = vsel %vm628, %v1278, 0
        %v1285 = vsel %vm628, %v1279, 0
        %v1287 = vsel %vm628, %v1276, 0
        %1289 = vmatprep.subr.mxu0 %v1285
        %1290 = vmatpush1.msra.mxu0 %v1283
        %1291 = vmatprep.subr.mxu0 0.0
        %1292 = vmatpush1.msra.mxu0 0.0
        %1293 = vmatprep.subr.mxu0 0.0
        %1294 = vmatpush1.msra.mxu0 0.0
        %1295 = vmatprep.subr.mxu0 0.0
        %1296 = vmatpush1.msra.mxu0 0.0
        %1297 = vmatprep.subr.mxu0 0.0
        %1298 = vmatpush1.msra.mxu0 0.0
        %1299 = vmatprep.subr.mxu0 0.0
        %1300 = vmatpush1.msra.mxu0 0.0
        %1301 = vmatprep.subr.mxu0 0.0
        %1302 = vmatpush1.msra.mxu0 0.0
        %1303 = vmatprep.subr.mxu0 0.0
        %1304 = vmatpush1.msra.mxu0 0.0
        %1305 = vmatprep.subr.mxu0 0.0
        %1306 = vmatpush1.msra.mxu0 0.0
        %1307 = vmatprep.subr.mxu0 0.0
        %1308 = vmatpush1.msra.mxu0 0.0
        %1309 = vmatprep.subr.mxu0 0.0
        %1310 = vmatpush1.msra.mxu0 0.0
        %1311 = vmatprep.subr.mxu0 0.0
        %1312 = vmatpush1.msra.mxu0 0.0
        %1313 = vmatprep.subr.mxu0 0.0
        %1314 = vmatpush1.msra.mxu0 0.0
        %1315 = vmatprep.subr.mxu0 0.0
        %1316 = vmatpush1.msra.mxu0 0.0
        %1317 = vmatprep.subr.mxu0 0.0
        %1318 = vmatpush1.msra.mxu0 0.0
        %1319 = vmatprep.subr.mxu0 0.0
        %1320 = vmatpush1.msra.mxu0 0.0
        %1321 = vmatprep.subr.mxu0 0.0
        %1322 = vmatpush1.msra.mxu0 0.0
        %1323 = vmatprep.subr.mxu0 0.0
        %1324 = vmatpush1.msra.mxu0 0.0
        %1325 = vmatprep.subr.mxu0 0.0
        %1326 = vmatpush1.msra.mxu0 0.0
        %1327 = vmatprep.subr.mxu0 0.0
        %1328 = vmatpush1.msra.mxu0 0.0
        %1329 = vmatprep.subr.mxu0 0.0
        %1330 = vmatpush1.msra.mxu0 0.0
        %1331 = vmatprep.subr.mxu0 0.0
        %1332 = vmatpush1.msra.mxu0 0.0
        %1333 = vmatprep.subr.mxu0 0.0
        %1334 = vmatpush1.msra.mxu0 0.0
        %1335 = vmatprep.subr.mxu0 0.0
        %1336 = vmatpush1.msra.mxu0 0.0
        %1337 = vmatprep.subr.mxu0 0.0
        %1338 = vmatpush1.msra.mxu0 0.0
        %1339 = vmatprep.subr.mxu0 0.0
        %1340 = vmatpush1.msra.mxu0 0.0
        %1341 = vmatprep.subr.mxu0 0.0
        %1342 = vmatpush1.msra.mxu0 0.0
        %1343 = vmatprep.subr.mxu0 0.0
        %1344 = vmatpush1.msra.mxu0 0.0
        %1345 = vmatprep.subr.mxu0 0.0
        %1346 = vmatpush1.msra.mxu0 0.0
        %1347 = vmatprep.subr.mxu0 0.0
        %1348 = vmatpush1.msra.mxu0 0.0
        %1349 = vmatprep.subr.mxu0 0.0
        %1350 = vmatpush1.msra.mxu0 0.0
        %1351 = vmatprep.subr.mxu0 0.0
        %1352 = vmatpush1.msra.mxu0 0.0
        %1353 = vmatprep.mubr.f32.mxu0 0.0
        %1354 = vmatmul.mubr.f32.gmra.mrb[0].mxu0 %v1281
        %v1355 = vpop.f32.mrb[0].mxu0
        %v1356 = vadd.f32 0.0, %v1355
        %v1357 = vpop.f32.mrb[0].mxu0
        %v1358 = vadd.f32 0.0, %v1357
        %1359 = vdwg.mxu0
        %1360 = vmatprep.subr.mxu0 0.0
        %1361 = vmatpush1.msra.mxu0 %v1287
        %1362 = vmatprep.subr.mxu0 0.0
        %1363 = vmatpush1.msra.mxu0 0.0
        %1364 = vmatprep.subr.mxu0 0.0
        %1365 = vmatpush1.msra.mxu0 0.0
        %1366 = vmatprep.subr.mxu0 0.0
        %1367 = vmatpush1.msra.mxu0 0.0
        %1368 = vmatprep.subr.mxu0 0.0
        %1369 = vmatpush1.msra.mxu0 0.0
        %1370 = vmatprep.subr.mxu0 0.0
        %1371 = vmatpush1.msra.mxu0 0.0
        %1372 = vmatprep.subr.mxu0 0.0
        %1373 = vmatpush1.msra.mxu0 0.0
        %1374 = vmatprep.subr.mxu0 0.0
        %1375 = vmatpush1.msra.mxu0 0.0
        %1376 = vmatprep.subr.mxu0 0.0
        %1377 = vmatpush1.msra.mxu0 0.0
        %1378 = vmatprep.subr.mxu0 0.0
        %1379 = vmatpush1.msra.mxu0 0.0
        %1380 = vmatprep.subr.mxu0 0.0
        %1381 = vmatpush1.msra.mxu0 0.0
        %1382 = vmatprep.subr.mxu0 0.0
        %1383 = vmatpush1.msra.mxu0 0.0
        %1384 = vmatprep.subr.mxu0 0.0
        %1385 = vmatpush1.msra.mxu0 0.0
        %1386 = vmatprep.subr.mxu0 0.0
        %1387 = vmatpush1.msra.mxu0 0.0
        %1388 = vmatprep.subr.mxu0 0.0
        %1389 = vmatpush1.msra.mxu0 0.0
        %1390 = vmatprep.subr.mxu0 0.0
        %1391 = vmatpush1.msra.mxu0 0.0
        %1392 = vmatprep.subr.mxu0 0.0
        %1393 = vmatpush1.msra.mxu0 0.0
        %1394 = vmatprep.subr.mxu0 0.0
        %1395 = vmatpush1.msra.mxu0 0.0
        %1396 = vmatprep.subr.mxu0 0.0
        %1397 = vmatpush1.msra.mxu0 0.0
        %1398 = vmatprep.subr.mxu0 0.0
        %1399 = vmatpush1.msra.mxu0 0.0
        %1400 = vmatprep.subr.mxu0 0.0
        %1401 = vmatpush1.msra.mxu0 0.0
        %1402 = vmatprep.subr.mxu0 0.0
        %1403 = vmatpush1.msra.mxu0 0.0
        %1404 = vmatprep.subr.mxu0 0.0
        %1405 = vmatpush1.msra.mxu0 0.0
        %1406 = vmatprep.subr.mxu0 0.0
        %1407 = vmatpush1.msra.mxu0 0.0
        %1408 = vmatprep.subr.mxu0 0.0
        %1409 = vmatpush1.msra.mxu0 0.0
        %1410 = vmatprep.subr.mxu0 0.0
        %1411 = vmatpush1.msra.mxu0 0.0
        %1412 = vmatprep.subr.mxu0 0.0
        %1413 = vmatpush1.msra.mxu0 0.0
        %1414 = vmatprep.subr.mxu0 0.0
        %1415 = vmatpush1.msra.mxu0 0.0
        %1416 = vmatprep.subr.mxu0 0.0
        %1417 = vmatpush1.msra.mxu0 0.0
        %1418 = vmatprep.subr.mxu0 0.0
        %1419 = vmatpush1.msra.mxu0 0.0
        %1420 = vmatprep.subr.mxu0 0.0
        %1421 = vmatpush1.msra.mxu0 0.0
        %1422 = vmatprep.subr.mxu0 0.0
        %1423 = vmatpush1.msra.mxu0 0.0
        %1424 = vmatprep.mubr.f32.mxu0 0.0
        %1425 = vmatmul.mubr.f32.gmra.mrb[0].mxu0 %v1281
        %v1426 = vpop.f32.mrb[0].mxu0
        %v1427 = vadd.f32 0.0, %v1426
        %v1428 = vpop.f32.mrb[0].mxu0
        %1429 = vdwg.mxu0
        %v1430 = vadd.f32 %v1261, %v1356
        %v1431 = vadd.f32 %v1262, %v1358
        %v1432 = vadd.f32 %v1263, %v1427
        %v1433 = vld [vmem:[#allocation2] sm:$0xff]
        %v1434 = vld [vmem:[#allocation2 + $0x8] sm:$0xf]
        %s1435 = scalar_lea.vmem %s232, 40
        %v1436 = vld [vmem:[%s1435] sm:$0xff]
        %v1439 = vcombine.high %v1433, %v1433
        %1440 = vrot.lane.b32.xlu0 %v1433, 108
        %v1441 = vpop.permute.xlu0 %1440
        %1442 = vrot.lane.b32.xlu0 %v1439, 108
        %v1443 = vpop.permute.xlu0 %1442
        %1444 = vrot.lane.b32.xlu0 %v1434, 108
        %v1445 = vpop.permute.xlu0 %1444
        %vm1446 = vcmask 883712
        %v1447 = vsel %vm1446, %v1441, %v1443
        %v1448 = vsel %vm1446, %v1443, %v1445
        %v1450 = vsel %vm624, %v1436, 0
        %v1452 = vsel %vm628, %v1447, 0
        %v1454 = vsel %vm628, %v1448, 0
        %v1456 = vsel %vm628, %v1445, 0
        %1458 = vmatprep.subr.mxu0 %v1454
        %1459 = vmatpush1.msra.mxu0 %v1452
        %1460 = vmatprep.subr.mxu0 0.0
        %1461 = vmatpush1.msra.mxu0 0.0
        %1462 = vmatprep.subr.mxu0 0.0
        %1463 = vmatpush1.msra.mxu0 0.0
        %1464 = vmatprep.subr.mxu0 0.0
        %1465 = vmatpush1.msra.mxu0 0.0
        %1466 = vmatprep.subr.mxu0 0.0
        %1467 = vmatpush1.msra.mxu0 0.0
        %1468 = vmatprep.subr.mxu0 0.0
        %1469 = vmatpush1.msra.mxu0 0.0
        %1470 = vmatprep.subr.mxu0 0.0
        %1471 = vmatpush1.msra.mxu0 0.0
        %1472 = vmatprep.subr.mxu0 0.0
        %1473 = vmatpush1.msra.mxu0 0.0
        %1474 = vmatprep.subr.mxu0 0.0
        %1475 = vmatpush1.msra.mxu0 0.0
        %1476 = vmatprep.subr.mxu0 0.0
        %1477 = vmatpush1.msra.mxu0 0.0
        %1478 = vmatprep.subr.mxu0 0.0
        %1479 = vmatpush1.msra.mxu0 0.0
        %1480 = vmatprep.subr.mxu0 0.0
        %1481 = vmatpush1.msra.mxu0 0.0
        %1482 = vmatprep.subr.mxu0 0.0
        %1483 = vmatpush1.msra.mxu0 0.0
        %1484 = vmatprep.subr.mxu0 0.0
        %1485 = vmatpush1.msra.mxu0 0.0
        %1486 = vmatprep.subr.mxu0 0.0
        %1487 = vmatpush1.msra.mxu0 0.0
        %1488 = vmatprep.subr.mxu0 0.0
        %1489 = vmatpush1.msra.mxu0 0.0
        %1490 = vmatprep.subr.mxu0 0.0
        %1491 = vmatpush1.msra.mxu0 0.0
        %1492 = vmatprep.subr.mxu0 0.0
        %1493 = vmatpush1.msra.mxu0 0.0
        %1494 = vmatprep.subr.mxu0 0.0
        %1495 = vmatpush1.msra.mxu0 0.0
        %1496 = vmatprep.subr.mxu0 0.0
        %1497 = vmatpush1.msra.mxu0 0.0
        %1498 = vmatprep.subr.mxu0 0.0
        %1499 = vmatpush1.msra.mxu0 0.0
        %1500 = vmatprep.subr.mxu0 0.0
        %1501 = vmatpush1.msra.mxu0 0.0
        %1502 = vmatprep.subr.mxu0 0.0
        %1503 = vmatpush1.msra.mxu0 0.0
        %1504 = vmatprep.subr.mxu0 0.0
        %1505 = vmatpush1.msra.mxu0 0.0
        %1506 = vmatprep.subr.mxu0 0.0
        %1507 = vmatpush1.msra.mxu0 0.0
        %1508 = vmatprep.subr.mxu0 0.0
        %1509 = vmatpush1.msra.mxu0 0.0
        %1510 = vmatprep.subr.mxu0 0.0
        %1511 = vmatpush1.msra.mxu0 0.0
        %1512 = vmatprep.subr.mxu0 0.0
        %1513 = vmatpush1.msra.mxu0 0.0
        %1514 = vmatprep.subr.mxu0 0.0
        %1515 = vmatpush1.msra.mxu0 0.0
        %1516 = vmatprep.subr.mxu0 0.0
        %1517 = vmatpush1.msra.mxu0 0.0
        %1518 = vmatprep.subr.mxu0 0.0
        %1519 = vmatpush1.msra.mxu0 0.0
        %1520 = vmatprep.subr.mxu0 0.0
        %1521 = vmatpush1.msra.mxu0 0.0
        %1522 = vmatprep.mubr.f32.mxu0 0.0
        %1523 = vmatmul.mubr.f32.gmra.mrb[0].mxu0 %v1450
        %v1524 = vpop.f32.mrb[0].mxu0
        %v1525 = vadd.f32 0.0, %v1524
        %v1526 = vpop.f32.mrb[0].mxu0
        %v1527 = vadd.f32 0.0, %v1526
        %1528 = vdwg.mxu0
        %1529 = vmatprep.subr.mxu0 0.0
        %1530 = vmatpush1.msra.mxu0 %v1456
        %1531 = vmatprep.subr.mxu0 0.0
        %1532 = vmatpush1.msra.mxu0 0.0
        %1533 = vmatprep.subr.mxu0 0.0
        %1534 = vmatpush1.msra.mxu0 0.0
        %1535 = vmatprep.subr.mxu0 0.0
        %1536 = vmatpush1.msra.mxu0 0.0
        %1537 = vmatprep.subr.mxu0 0.0
        %1538 = vmatpush1.msra.mxu0 0.0
        %1539 = vmatprep.subr.mxu0 0.0
        %1540 = vmatpush1.msra.mxu0 0.0
        %1541 = vmatprep.subr.mxu0 0.0
        %1542 = vmatpush1.msra.mxu0 0.0
        %1543 = vmatprep.subr.mxu0 0.0
        %1544 = vmatpush1.msra.mxu0 0.0
        %1545 = vmatprep.subr.mxu0 0.0
        %1546 = vmatpush1.msra.mxu0 0.0
        %1547 = vmatprep.subr.mxu0 0.0
        %1548 = vmatpush1.msra.mxu0 0.0
        %1549 = vmatprep.subr.mxu0 0.0
        %1550 = vmatpush1.msra.mxu0 0.0
        %1551 = vmatprep.subr.mxu0 0.0
        %1552 = vmatpush1.msra.mxu0 0.0
        %1553 = vmatprep.subr.mxu0 0.0
        %1554 = vmatpush1.msra.mxu0 0.0
        %1555 = vmatprep.subr.mxu0 0.0
        %1556 = vmatpush1.msra.mxu0 0.0
        %1557 = vmatprep.subr.mxu0 0.0
        %1558 = vmatpush1.msra.mxu0 0.0
        %1559 = vmatprep.subr.mxu0 0.0
        %1560 = vmatpush1.msra.mxu0 0.0
        %1561 = vmatprep.subr.mxu0 0.0
        %1562 = vmatpush1.msra.mxu0 0.0
        %1563 = vmatprep.subr.mxu0 0.0
        %1564 = vmatpush1.msra.mxu0 0.0
        %1565 = vmatprep.subr.mxu0 0.0
        %1566 = vmatpush1.msra.mxu0 0.0
        %1567 = vmatprep.subr.mxu0 0.0
        %1568 = vmatpush1.msra.mxu0 0.0
        %1569 = vmatprep.subr.mxu0 0.0
        %1570 = vmatpush1.msra.mxu0 0.0
        %1571 = vmatprep.subr.mxu0 0.0
        %1572 = vmatpush1.msra.mxu0 0.0
        %1573 = vmatprep.subr.mxu0 0.0
        %1574 = vmatpush1.msra.mxu0 0.0
        %1575 = vmatprep.subr.mxu0 0.0
        %1576 = vmatpush1.msra.mxu0 0.0
        %1577 = vmatprep.subr.mxu0 0.0
        %1578 = vmatpush1.msra.mxu0 0.0
        %1579 = vmatprep.subr.mxu0 0.0
        %1580 = vmatpush1.msra.mxu0 0.0
        %1581 = vmatprep.subr.mxu0 0.0
        %1582 = vmatpush1.msra.mxu0 0.0
        %1583 = vmatprep.subr.mxu0 0.0
        %1584 = vmatpush1.msra.mxu0 0.0
        %1585 = vmatprep.subr.mxu0 0.0
        %1586 = vmatpush1.msra.mxu0 0.0
        %1587 = vmatprep.subr.mxu0 0.0
        %1588 = vmatpush1.msra.mxu0 0.0
        %1589 = vmatprep.subr.mxu0 0.0
        %1590 = vmatpush1.msra.mxu0 0.0
        %1591 = vmatprep.subr.mxu0 0.0
        %1592 = vmatpush1.msra.mxu0 0.0
        %1593 = vmatprep.mubr.f32.mxu0 0.0
        %1594 = vmatmul.mubr.f32.gmra.mrb[0].mxu0 %v1450
        %v1595 = vpop.f32.mrb[0].mxu0
        %v1596 = vadd.f32 0.0, %v1595
        %v1597 = vpop.f32.mrb[0].mxu0
        %1598 = vdwg.mxu0
        %v1599 = vadd.f32 %v1430, %v1525
        %v1600 = vadd.f32 %v1431, %v1527
        %v1601 = vadd.f32 %v1432, %v1596
        %v1602 = vld [vmem:[#allocation2] sm:$0xff]
        %v1603 = vld [vmem:[#allocation2 + $0x8] sm:$0xf]
        %s1604 = scalar_lea.vmem %s232, 48
        %v1605 = vld [vmem:[%s1604] sm:$0xff]
        %v1608 = vcombine.high %v1602, %v1602
        %1609 = vrot.lane.b32.xlu0 %v1602, 92
        %v1610 = vpop.permute.xlu0 %1609
        %1611 = vrot.lane.b32.xlu0 %v1608, 92
        %v1612 = vpop.permute.xlu0 %1611
        %1613 = vrot.lane.b32.xlu0 %v1603, 92
        %v1614 = vpop.permute.xlu0 %1613
        %vm1615 = vcmask 752640
        %v1616 = vsel %vm1615, %v1610, %v1612
        %v1617 = vsel %vm1615, %v1612, %v1614
        %v1619 = vsel %vm624, %v1605, 0
        %v1621 = vsel %vm628, %v1616, 0
        %v1623 = vsel %vm628, %v1617, 0
        %v1625 = vsel %vm628, %v1614, 0
        %1627 = vmatprep.subr.mxu0 %v1623
        %1628 = vmatpush1.msra.mxu0 %v1621
        %1629 = vmatprep.subr.mxu0 0.0
        %1630 = vmatpush1.msra.mxu0 0.0
        %1631 = vmatprep.subr.mxu0 0.0
        %1632 = vmatpush1.msra.mxu0 0.0
        %1633 = vmatprep.subr.mxu0 0.0
        %1634 = vmatpush1.msra.mxu0 0.0
        %1635 = vmatprep.subr.mxu0 0.0
        %1636 = vmatpush1.msra.mxu0 0.0
        %1637 = vmatprep.subr.mxu0 0.0
        %1638 = vmatpush1.msra.mxu0 0.0
        %1639 = vmatprep.subr.mxu0 0.0
        %1640 = vmatpush1.msra.mxu0 0.0
        %1641 = vmatprep.subr.mxu0 0.0
        %1642 = vmatpush1.msra.mxu0 0.0
        %1643 = vmatprep.subr.mxu0 0.0
        %1644 = vmatpush1.msra.mxu0 0.0
        %1645 = vmatprep.subr.mxu0 0.0
        %1646 = vmatpush1.msra.mxu0 0.0
        %1647 = vmatprep.subr.mxu0 0.0
        %1648 = vmatpush1.msra.mxu0 0.0
        %1649 = vmatprep.subr.mxu0 0.0
        %1650 = vmatpush1.msra.mxu0 0.0
        %1651 = vmatprep.subr.mxu0 0.0
        %1652 = vmatpush1.msra.mxu0 0.0
        %1653 = vmatprep.subr.mxu0 0.0
        %1654 = vmatpush1.msra.mxu0 0.0
        %1655 = vmatprep.subr.mxu0 0.0
        %1656 = vmatpush1.msra.mxu0 0.0
        %1657 = vmatprep.subr.mxu0 0.0
        %1658 = vmatpush1.msra.mxu0 0.0
        %1659 = vmatprep.subr.mxu0 0.0
        %1660 = vmatpush1.msra.mxu0 0.0
        %1661 = vmatprep.subr.mxu0 0.0
        %1662 = vmatpush1.msra.mxu0 0.0
        %1663 = vmatprep.subr.mxu0 0.0
        %1664 = vmatpush1.msra.mxu0 0.0
        %1665 = vmatprep.subr.mxu0 0.0
        %1666 = vmatpush1.msra.mxu0 0.0
        %1667 = vmatprep.subr.mxu0 0.0
        %1668 = vmatpush1.msra.mxu0 0.0
        %1669 = vmatprep.subr.mxu0 0.0
        %1670 = vmatpush1.msra.mxu0 0.0
        %1671 = vmatprep.subr.mxu0 0.0
        %1672 = vmatpush1.msra.mxu0 0.0
        %1673 = vmatprep.subr.mxu0 0.0
        %1674 = vmatpush1.msra.mxu0 0.0
        %1675 = vmatprep.subr.mxu0 0.0
        %1676 = vmatpush1.msra.mxu0 0.0
        %1677 = vmatprep.subr.mxu0 0.0
        %1678 = vmatpush1.msra.mxu0 0.0
        %1679 = vmatprep.subr.mxu0 0.0
        %1680 = vmatpush1.msra.mxu0 0.0
        %1681 = vmatprep.subr.mxu0 0.0
        %1682 = vmatpush1.msra.mxu0 0.0
        %1683 = vmatprep.subr.mxu0 0.0
        %1684 = vmatpush1.msra.mxu0 0.0
        %1685 = vmatprep.subr.mxu0 0.0
        %1686 = vmatpush1.msra.mxu0 0.0
        %1687 = vmatprep.subr.mxu0 0.0
        %1688 = vmatpush1.msra.mxu0 0.0
        %1689 = vmatprep.subr.mxu0 0.0
        %1690 = vmatpush1.msra.mxu0 0.0
        %1691 = vmatprep.mubr.f32.mxu0 0.0
        %1692 = vmatmul.mubr.f32.gmra.mrb[0].mxu0 %v1619
        %v1693 = vpop.f32.mrb[0].mxu0
        %v1694 = vadd.f32 0.0, %v1693
        %v1695 = vpop.f32.mrb[0].mxu0
        %v1696 = vadd.f32 0.0, %v1695
        %1697 = vdwg.mxu0
        %1698 = vmatprep.subr.mxu0 0.0
        %1699 = vmatpush1.msra.mxu0 %v1625
        %1700 = vmatprep.subr.mxu0 0.0
        %1701 = vmatpush1.msra.mxu0 0.0
        %1702 = vmatprep.subr.mxu0 0.0
        %1703 = vmatpush1.msra.mxu0 0.0
        %1704 = vmatprep.subr.mxu0 0.0
        %1705 = vmatpush1.msra.mxu0 0.0
        %1706 = vmatprep.subr.mxu0 0.0
        %1707 = vmatpush1.msra.mxu0 0.0
        %1708 = vmatprep.subr.mxu0 0.0
        %1709 = vmatpush1.msra.mxu0 0.0
        %1710 = vmatprep.subr.mxu0 0.0
        %1711 = vmatpush1.msra.mxu0 0.0
        %1712 = vmatprep.subr.mxu0 0.0
        %1713 = vmatpush1.msra.mxu0 0.0
        %1714 = vmatprep.subr.mxu0 0.0
        %1715 = vmatpush1.msra.mxu0 0.0
        %1716 = vmatprep.subr.mxu0 0.0
        %1717 = vmatpush1.msra.mxu0 0.0
        %1718 = vmatprep.subr.mxu0 0.0
        %1719 = vmatpush1.msra.mxu0 0.0
        %1720 = vmatprep.subr.mxu0 0.0
        %1721 = vmatpush1.msra.mxu0 0.0
        %1722 = vmatprep.subr.mxu0 0.0
        %1723 = vmatpush1.msra.mxu0 0.0
        %1724 = vmatprep.subr.mxu0 0.0
        %1725 = vmatpush1.msra.mxu0 0.0
        %1726 = vmatprep.subr.mxu0 0.0
        %1727 = vmatpush1.msra.mxu0 0.0
        %1728 = vmatprep.subr.mxu0 0.0
        %1729 = vmatpush1.msra.mxu0 0.0
        %1730 = vmatprep.subr.mxu0 0.0
        %1731 = vmatpush1.msra.mxu0 0.0
        %1732 = vmatprep.subr.mxu0 0.0
        %1733 = vmatpush1.msra.mxu0 0.0
        %1734 = vmatprep.subr.mxu0 0.0
        %1735 = vmatpush1.msra.mxu0 0.0
        %1736 = vmatprep.subr.mxu0 0.0
        %1737 = vmatpush1.msra.mxu0 0.0
        %1738 = vmatprep.subr.mxu0 0.0
        %1739 = vmatpush1.msra.mxu0 0.0
        %1740 = vmatprep.subr.mxu0 0.0
        %1741 = vmatpush1.msra.mxu0 0.0
        %1742 = vmatprep.subr.mxu0 0.0
        %1743 = vmatpush1.msra.mxu0 0.0
        %1744 = vmatprep.subr.mxu0 0.0
        %1745 = vmatpush1.msra.mxu0 0.0
        %1746 = vmatprep.subr.mxu0 0.0
        %1747 = vmatpush1.msra.mxu0 0.0
        %1748 = vmatprep.subr.mxu0 0.0
        %1749 = vmatpush1.msra.mxu0 0.0
        %1750 = vmatprep.subr.mxu0 0.0
        %1751 = vmatpush1.msra.mxu0 0.0
        %1752 = vmatprep.subr.mxu0 0.0
        %1753 = vmatpush1.msra.mxu0 0.0
        %1754 = vmatprep.subr.mxu0 0.0
        %1755 = vmatpush1.msra.mxu0 0.0
        %1756 = vmatprep.subr.mxu0 0.0
        %1757 = vmatpush1.msra.mxu0 0.0
        %1758 = vmatprep.subr.mxu0 0.0
        %1759 = vmatpush1.msra.mxu0 0.0
        %1760 = vmatprep.subr.mxu0 0.0
        %1761 = vmatpush1.msra.mxu0 0.0
        %1762 = vmatprep.mubr.f32.mxu0 0.0
        %1763 = vmatmul.mubr.f32.gmra.mrb[0].mxu0 %v1619
        %v1764 = vpop.f32.mrb[0].mxu0
        %v1765 = vadd.f32 0.0, %v1764
        %v1766 = vpop.f32.mrb[0].mxu0
        %1767 = vdwg.mxu0
        %v1768 = vadd.f32 %v1599, %v1694
        %v1769 = vadd.f32 %v1600, %v1696
        %v1770 = vadd.f32 %v1601, %v1765
        %v1771 = vld [vmem:[#allocation2] sm:$0xff]
        %v1772 = vld [vmem:[#allocation2 + $0x8] sm:$0xf]
        %s1773 = scalar_lea.vmem %s232, 56
        %v1774 = vld [vmem:[%s1773] sm:$0xff]
        %v1777 = vcombine.high %v1771, %v1771
        %1778 = vrot.lane.b32.xlu0 %v1771, 91
        %v1779 = vpop.permute.xlu0 %1778
        %1780 = vrot.lane.b32.xlu0 %v1777, 91
        %v1781 = vpop.permute.xlu0 %1780
        %1782 = vrot.lane.b32.xlu0 %v1772, 91
        %v1783 = vpop.permute.xlu0 %1782
        %vm1784 = vcmask 744448
        %v1785 = vsel %vm1784, %v1779, %v1781
        %v1786 = vsel %vm1784, %v1781, %v1783
        %v1788 = vsel %vm624, %v1774, 0
        %v1790 = vsel %vm628, %v1785, 0
        %v1792 = vsel %vm628, %v1786, 0
        %v1794 = vsel %vm628, %v1783, 0
        %1796 = vmatprep.subr.mxu0 %v1792
        %1797 = vmatpush1.msra.mxu0 %v1790
        %1798 = vmatprep.subr.mxu0 0.0
        %1799 = vmatpush1.msra.mxu0 0.0
        %1800 = vmatprep.subr.mxu0 0.0
        %1801 = vmatpush1.msra.mxu0 0.0
        %1802 = vmatprep.subr.mxu0 0.0
        %1803 = vmatpush1.msra.mxu0 0.0
        %1804 = vmatprep.subr.mxu0 0.0
        %1805 = vmatpush1.msra.mxu0 0.0
        %1806 = vmatprep.subr.mxu0 0.0
        %1807 = vmatpush1.msra.mxu0 0.0
        %1808 = vmatprep.subr.mxu0 0.0
        %1809 = vmatpush1.msra.mxu0 0.0
        %1810 = vmatprep.subr.mxu0 0.0
        %1811 = vmatpush1.msra.mxu0 0.0
        %1812 = vmatprep.subr.mxu0 0.0
        %1813 = vmatpush1.msra.mxu0 0.0
        %1814 = vmatprep.subr.mxu0 0.0
        %1815 = vmatpush1.msra.mxu0 0.0
        %1816 = vmatprep.subr.mxu0 0.0
        %1817 = vmatpush1.msra.mxu0 0.0
        %1818 = vmatprep.subr.mxu0 0.0
        %1819 = vmatpush1.msra.mxu0 0.0
        %1820 = vmatprep.subr.mxu0 0.0
        %1821 = vmatpush1.msra.mxu0 0.0
        %1822 = vmatprep.subr.mxu0 0.0
        %1823 = vmatpush1.msra.mxu0 0.0
        %1824 = vmatprep.subr.mxu0 0.0
        %1825 = vmatpush1.msra.mxu0 0.0
        %1826 = vmatprep.subr.mxu0 0.0
        %1827 = vmatpush1.msra.mxu0 0.0
        %1828 = vmatprep.subr.mxu0 0.0
        %1829 = vmatpush1.msra.mxu0 0.0
        %1830 = vmatprep.subr.mxu0 0.0
        %1831 = vmatpush1.msra.mxu0 0.0
        %1832 = vmatprep.subr.mxu0 0.0
        %1833 = vmatpush1.msra.mxu0 0.0
        %1834 = vmatprep.subr.mxu0 0.0
        %1835 = vmatpush1.msra.mxu0 0.0
        %1836 = vmatprep.subr.mxu0 0.0
        %1837 = vmatpush1.msra.mxu0 0.0
        %1838 = vmatprep.subr.mxu0 0.0
        %1839 = vmatpush1.msra.mxu0 0.0
        %1840 = vmatprep.subr.mxu0 0.0
        %1841 = vmatpush1.msra.mxu0 0.0
        %1842 = vmatprep.subr.mxu0 0.0
        %1843 = vmatpush1.msra.mxu0 0.0
        %1844 = vmatprep.subr.mxu0 0.0
        %1845 = vmatpush1.msra.mxu0 0.0
        %1846 = vmatprep.subr.mxu0 0.0
        %1847 = vmatpush1.msra.mxu0 0.0
        %1848 = vmatprep.subr.mxu0 0.0
        %1849 = vmatpush1.msra.mxu0 0.0
        %1850 = vmatprep.subr.mxu0 0.0
        %1851 = vmatpush1.msra.mxu0 0.0
        %1852 = vmatprep.subr.mxu0 0.0
        %1853 = vmatpush1.msra.mxu0 0.0
        %1854 = vmatprep.subr.mxu0 0.0
        %1855 = vmatpush1.msra.mxu0 0.0
        %1856 = vmatprep.subr.mxu0 0.0
        %1857 = vmatpush1.msra.mxu0 0.0
        %1858 = vmatprep.subr.mxu0 0.0
        %1859 = vmatpush1.msra.mxu0 0.0
        %1860 = vmatprep.mubr.f32.mxu0 0.0
        %1861 = vmatmul.mubr.f32.gmra.mrb[0].mxu0 %v1788
        %v1862 = vpop.f32.mrb[0].mxu0
        %v1863 = vadd.f32 0.0, %v1862
        %v1864 = vpop.f32.mrb[0].mxu0
        %v1865 = vadd.f32 0.0, %v1864
        %1866 = vdwg.mxu0
        %1867 = vmatprep.subr.mxu0 0.0
        %1868 = vmatpush1.msra.mxu0 %v1794
        %1869 = vmatprep.subr.mxu0 0.0
        %1870 = vmatpush1.msra.mxu0 0.0
        %1871 = vmatprep.subr.mxu0 0.0
        %1872 = vmatpush1.msra.mxu0 0.0
        %1873 = vmatprep.subr.mxu0 0.0
        %1874 = vmatpush1.msra.mxu0 0.0
        %1875 = vmatprep.subr.mxu0 0.0
        %1876 = vmatpush1.msra.mxu0 0.0
        %1877 = vmatprep.subr.mxu0 0.0
        %1878 = vmatpush1.msra.mxu0 0.0
        %1879 = vmatprep.subr.mxu0 0.0
        %1880 = vmatpush1.msra.mxu0 0.0
        %1881 = vmatprep.subr.mxu0 0.0
        %1882 = vmatpush1.msra.mxu0 0.0
        %1883 = vmatprep.subr.mxu0 0.0
        %1884 = vmatpush1.msra.mxu0 0.0
        %1885 = vmatprep.subr.mxu0 0.0
        %1886 = vmatpush1.msra.mxu0 0.0
        %1887 = vmatprep.subr.mxu0 0.0
        %1888 = vmatpush1.msra.mxu0 0.0
        %1889 = vmatprep.subr.mxu0 0.0
        %1890 = vmatpush1.msra.mxu0 0.0
        %1891 = vmatprep.subr.mxu0 0.0
        %1892 = vmatpush1.msra.mxu0 0.0
        %1893 = vmatprep.subr.mxu0 0.0
        %1894 = vmatpush1.msra.mxu0 0.0
        %1895 = vmatprep.subr.mxu0 0.0
        %1896 = vmatpush1.msra.mxu0 0.0
        %1897 = vmatprep.subr.mxu0 0.0
        %1898 = vmatpush1.msra.mxu0 0.0
        %1899 = vmatprep.subr.mxu0 0.0
        %1900 = vmatpush1.msra.mxu0 0.0
        %1901 = vmatprep.subr.mxu0 0.0
        %1902 = vmatpush1.msra.mxu0 0.0
        %1903 = vmatprep.subr.mxu0 0.0
        %1904 = vmatpush1.msra.mxu0 0.0
        %1905 = vmatprep.subr.mxu0 0.0
        %1906 = vmatpush1.msra.mxu0 0.0
        %1907 = vmatprep.subr.mxu0 0.0
        %1908 = vmatpush1.msra.mxu0 0.0
        %1909 = vmatprep.subr.mxu0 0.0
        %1910 = vmatpush1.msra.mxu0 0.0
        %1911 = vmatprep.subr.mxu0 0.0
        %1912 = vmatpush1.msra.mxu0 0.0
        %1913 = vmatprep.subr.mxu0 0.0
        %1914 = vmatpush1.msra.mxu0 0.0
        %1915 = vmatprep.subr.mxu0 0.0
        %1916 = vmatpush1.msra.mxu0 0.0
        %1917 = vmatprep.subr.mxu0 0.0
        %1918 = vmatpush1.msra.mxu0 0.0
        %1919 = vmatprep.subr.mxu0 0.0
        %1920 = vmatpush1.msra.mxu0 0.0
        %1921 = vmatprep.subr.mxu0 0.0
        %1922 = vmatpush1.msra.mxu0 0.0
        %1923 = vmatprep.subr.mxu0 0.0
        %1924 = vmatpush1.msra.mxu0 0.0
        %1925 = vmatprep.subr.mxu0 0.0
        %1926 = vmatpush1.msra.mxu0 0.0
        %1927 = vmatprep.subr.mxu0 0.0
        %1928 = vmatpush1.msra.mxu0 0.0
        %1929 = vmatprep.subr.mxu0 0.0
        %1930 = vmatpush1.msra.mxu0 0.0
        %1931 = vmatprep.mubr.f32.mxu0 0.0
        %1932 = vmatmul.mubr.f32.gmra.mrb[0].mxu0 %v1788
        %v1933 = vpop.f32.mrb[0].mxu0
        %v1934 = vadd.f32 0.0, %v1933
        %v1935 = vpop.f32.mrb[0].mxu0
        %1936 = vdwg.mxu0
        %v1937 = vadd.f32 %v1768, %v1863
        %v1938 = vadd.f32 %v1769, %v1865
        %v1939 = vadd.f32 %v1770, %v1934
        %v1940 = vld [vmem:[#allocation2] sm:$0xff]
        %v1941 = vld [vmem:[#allocation2 + $0x8] sm:$0xf]
        %s1942 = scalar_lea.vmem %s232, 64
        %v1943 = vld [vmem:[%s1942] sm:$0xff]
        %v1946 = vcombine.high %v1940, %v1940
        %1947 = vrot.lane.b32.xlu0 %v1940, 90
        %v1948 = vpop.permute.xlu0 %1947
        %1949 = vrot.lane.b32.xlu0 %v1946, 90
        %v1950 = vpop.permute.xlu0 %1949
        %1951 = vrot.lane.b32.xlu0 %v1941, 90
        %v1952 = vpop.permute.xlu0 %1951
        %vm1953 = vcmask 736256
        %v1954 = vsel %vm1953, %v1948, %v1950
        %v1955 = vsel %vm1953, %v1950, %v1952
        %v1957 = vsel %vm624, %v1943, 0
        %v1959 = vsel %vm628, %v1954, 0
        %v1961 = vsel %vm628, %v1955, 0
        %v1963 = vsel %vm628, %v1952, 0
        %1965 = vmatprep.subr.mxu0 %v1961
        %1966 = vmatpush1.msra.mxu0 %v1959
        %1967 = vmatprep.subr.mxu0 0.0
        %1968 = vmatpush1.msra.mxu0 0.0
        %1969 = vmatprep.subr.mxu0 0.0
        %1970 = vmatpush1.msra.mxu0 0.0
        %1971 = vmatprep.subr.mxu0 0.0
        %1972 = vmatpush1.msra.mxu0 0.0
        %1973 = vmatprep.subr.mxu0 0.0
        %1974 = vmatpush1.msra.mxu0 0.0
        %1975 = vmatprep.subr.mxu0 0.0
        %1976 = vmatpush1.msra.mxu0 0.0
        %1977 = vmatprep.subr.mxu0 0.0
        %1978 = vmatpush1.msra.mxu0 0.0
        %1979 = vmatprep.subr.mxu0 0.0
        %1980 = vmatpush1.msra.mxu0 0.0
        %1981 = vmatprep.subr.mxu0 0.0
        %1982 = vmatpush1.msra.mxu0 0.0
        %1983 = vmatprep.subr.mxu0 0.0
        %1984 = vmatpush1.msra.mxu0 0.0
        %1985 = vmatprep.subr.mxu0 0.0
        %1986 = vmatpush1.msra.mxu0 0.0
        %1987 = vmatprep.subr.mxu0 0.0
        %1988 = vmatpush1.msra.mxu0 0.0
        %1989 = vmatprep.subr.mxu0 0.0
        %1990 = vmatpush1.msra.mxu0 0.0
        %1991 = vmatprep.subr.mxu0 0.0
        %1992 = vmatpush1.msra.mxu0 0.0
        %1993 = vmatprep.subr.mxu0 0.0
        %1994 = vmatpush1.msra.mxu0 0.0
        %1995 = vmatprep.subr.mxu0 0.0
        %1996 = vmatpush1.msra.mxu0 0.0
        %1997 = vmatprep.subr.mxu0 0.0
        %1998 = vmatpush1.msra.mxu0 0.0
        %1999 = vmatprep.subr.mxu0 0.0
        %2000 = vmatpush1.msra.mxu0 0.0
        %2001 = vmatprep.subr.mxu0 0.0
        %2002 = vmatpush1.msra.mxu0 0.0
        %2003 = vmatprep.subr.mxu0 0.0
        %2004 = vmatpush1.msra.mxu0 0.0
        %2005 = vmatprep.subr.mxu0 0.0
        %2006 = vmatpush1.msra.mxu0 0.0
        %2007 = vmatprep.subr.mxu0 0.0
        %2008 = vmatpush1.msra.mxu0 0.0
        %2009 = vmatprep.subr.mxu0 0.0
        %2010 = vmatpush1.msra.mxu0 0.0
        %2011 = vmatprep.subr.mxu0 0.0
        %2012 = vmatpush1.msra.mxu0 0.0
        %2013 = vmatprep.subr.mxu0 0.0
        %2014 = vmatpush1.msra.mxu0 0.0
        %2015 = vmatprep.subr.mxu0 0.0
        %2016 = vmatpush1.msra.mxu0 0.0
        %2017 = vmatprep.subr.mxu0 0.0
        %2018 = vmatpush1.msra.mxu0 0.0
        %2019 = vmatprep.subr.mxu0 0.0
        %2020 = vmatpush1.msra.mxu0 0.0
        %2021 = vmatprep.subr.mxu0 0.0
        %2022 = vmatpush1.msra.mxu0 0.0
        %2023 = vmatprep.subr.mxu0 0.0
        %2024 = vmatpush1.msra.mxu0 0.0
        %2025 = vmatprep.subr.mxu0 0.0
        %2026 = vmatpush1.msra.mxu0 0.0
        %2027 = vmatprep.subr.mxu0 0.0
        %2028 = vmatpush1.msra.mxu0 0.0
        %2029 = vmatprep.mubr.f32.mxu0 0.0
        %2030 = vmatmul.mubr.f32.gmra.mrb[0].mxu0 %v1957
        %v2031 = vpop.f32.mrb[0].mxu0
        %v2032 = vadd.f32 0.0, %v2031
        %v2033 = vpop.f32.mrb[0].mxu0
        %v2034 = vadd.f32 0.0, %v2033
        %2035 = vdwg.mxu0
        %2036 = vmatprep.subr.mxu0 0.0
        %2037 = vmatpush1.msra.mxu0 %v1963
        %2038 = vmatprep.subr.mxu0 0.0
        %2039 = vmatpush1.msra.mxu0 0.0
        %2040 = vmatprep.subr.mxu0 0.0
        %2041 = vmatpush1.msra.mxu0 0.0
        %2042 = vmatprep.subr.mxu0 0.0
        %2043 = vmatpush1.msra.mxu0 0.0
        %2044 = vmatprep.subr.mxu0 0.0
        %2045 = vmatpush1.msra.mxu0 0.0
        %2046 = vmatprep.subr.mxu0 0.0
        %2047 = vmatpush1.msra.mxu0 0.0
        %2048 = vmatprep.subr.mxu0 0.0
        %2049 = vmatpush1.msra.mxu0 0.0
        %2050 = vmatprep.subr.mxu0 0.0
        %2051 = vmatpush1.msra.mxu0 0.0
        %2052 = vmatprep.subr.mxu0 0.0
        %2053 = vmatpush1.msra.mxu0 0.0
        %2054 = vmatprep.subr.mxu0 0.0
        %2055 = vmatpush1.msra.mxu0 0.0
        %2056 = vmatprep.subr.mxu0 0.0
        %2057 = vmatpush1.msra.mxu0 0.0
        %2058 = vmatprep.subr.mxu0 0.0
        %2059 = vmatpush1.msra.mxu0 0.0
        %2060 = vmatprep.subr.mxu0 0.0
        %2061 = vmatpush1.msra.mxu0 0.0
        %2062 = vmatprep.subr.mxu0 0.0
        %2063 = vmatpush1.msra.mxu0 0.0
        %2064 = vmatprep.subr.mxu0 0.0
        %2065 = vmatpush1.msra.mxu0 0.0
        %2066 = vmatprep.subr.mxu0 0.0
        %2067 = vmatpush1.msra.mxu0 0.0
        %2068 = vmatprep.subr.mxu0 0.0
        %2069 = vmatpush1.msra.mxu0 0.0
        %2070 = vmatprep.subr.mxu0 0.0
        %2071 = vmatpush1.msra.mxu0 0.0
        %2072 = vmatprep.subr.mxu0 0.0
        %2073 = vmatpush1.msra.mxu0 0.0
        %2074 = vmatprep.subr.mxu0 0.0
        %2075 = vmatpush1.msra.mxu0 0.0
        %2076 = vmatprep.subr.mxu0 0.0
        %2077 = vmatpush1.msra.mxu0 0.0
        %2078 = vmatprep.subr.mxu0 0.0
        %2079 = vmatpush1.msra.mxu0 0.0
        %2080 = vmatprep.subr.mxu0 0.0
        %2081 = vmatpush1.msra.mxu0 0.0
        %2082 = vmatprep.subr.mxu0 0.0
        %2083 = vmatpush1.msra.mxu0 0.0
        %2084 = vmatprep.subr.mxu0 0.0
        %2085 = vmatpush1.msra.mxu0 0.0
        %2086 = vmatprep.subr.mxu0 0.0
        %2087 = vmatpush1.msra.mxu0 0.0
        %2088 = vmatprep.subr.mxu0 0.0
        %2089 = vmatpush1.msra.mxu0 0.0
        %2090 = vmatprep.subr.mxu0 0.0
        %2091 = vmatpush1.msra.mxu0 0.0
        %2092 = vmatprep.subr.mxu0 0.0
        %2093 = vmatpush1.msra.mxu0 0.0
        %2094 = vmatprep.subr.mxu0 0.0
        %2095 = vmatpush1.msra.mxu0 0.0
        %2096 = vmatprep.subr.mxu0 0.0
        %2097 = vmatpush1.msra.mxu0 0.0
        %2098 = vmatprep.subr.mxu0 0.0
        %2099 = vmatpush1.msra.mxu0 0.0
        %2100 = vmatprep.mubr.f32.mxu0 0.0
        %2101 = vmatmul.mubr.f32.gmra.mrb[0].mxu0 %v1957
        %v2102 = vpop.f32.mrb[0].mxu0
        %v2103 = vadd.f32 0.0, %v2102
        %v2104 = vpop.f32.mrb[0].mxu0
        %2105 = vdwg.mxu0
        %v2106 = vadd.f32 %v1937, %v2032
        %v2107 = vadd.f32 %v1938, %v2034
        %v2108 = vadd.f32 %v1939, %v2103
        %v2109 = vmul.f32 %v2106, 0.0078125
        %v2110 = vmul.f32 %v2107, 0.0078125
        %v2111 = vmul.f32 %v2108, 0.0078125
        %v2112 = vld [vmem:[%s236] sm:$0xff]
        %2114 = vset.pattern.permute.xlu0 0
        %2115 = vperm.xlu0 %2114, %v2112
        %v2116 = vpop.permute.xlu0 %2115
        %v2118 = vadd.f32 %v2109, %v2116
        %v2119 = vadd.f32 %v2110, %v2116
        %v2120 = vadd.f32 %v2111, %v2116
        %vm2121 = vcmask 130048
        %2122 = vst.msk [vmem:[%s228] sm:$0xff] %vm2121, %v2118
        %2124 = vrot.lane.b32.xlu0 %v2118, 126
        %v2125 = vpop.permute.xlu0 %2124
        %vm2127 = vcmask 261248
        %2128 = vst.msk [vmem:[%s228] sm:$0xff] %vm2127, %v2125
        %2129 = vrot.lane.b32.xlu0 %v2118, 124
        %v2130 = vpop.permute.xlu0 %2129
        %vm2132 = vcmask 392448
        %2133 = vst.msk [vmem:[%s228] sm:$0xff] %vm2132, %v2130
        %2134 = vrot.lane.b32.xlu0 %v2118, 122
        %v2135 = vpop.permute.xlu0 %2134
        %vm2137 = vcmask 523648
        %2138 = vst.msk [vmem:[%s228] sm:$0xff] %vm2137, %v2135
        %2139 = vrot.lane.b32.xlu0 %v2118, 120
        %v2140 = vpop.permute.xlu0 %2139
        %vm2142 = vcmask 654848
        %2143 = vst.msk [vmem:[%s228] sm:$0xff] %vm2142, %v2140
        %2144 = vrot.lane.b32.xlu0 %v2118, 118
        %v2145 = vpop.permute.xlu0 %2144
        %vm2147 = vcmask 786048
        %2148 = vst.msk [vmem:[%s228] sm:$0xff] %vm2147, %v2145
        %2149 = vrot.lane.b32.xlu0 %v2118, 116
        %v2150 = vpop.permute.xlu0 %2149
        %vm2152 = vcmask 917248
        %2153 = vst.msk [vmem:[%s228] sm:$0xff] %vm2152, %v2150
        %2155 = vrot.lane.b32.xlu0 %v2118, 114
        %v2156 = vpop.permute.xlu0 %2155
        %2157 = vrot.lane.b32.xlu0 %v2119, 114
        %v2158 = vpop.permute.xlu0 %2157
        %vm2159 = vcmask 932864
        %v2160 = vsel %vm2159, %v2156, %v2158
        %vm2162 = vcmask 1048448
        %2163 = vst.msk [vmem:[%s228] sm:$0xff] %vm2162, %v2160
        %2164 = vrot.lane.b32.xlu0 %v2119, 112
        %v2165 = vpop.permute.xlu0 %2164
        %2167 = vst.msk [vmem:[%s228 + $0x8] sm:$0xff] %vm2121, %v2165
        %2168 = vrot.lane.b32.xlu0 %v2119, 110
        %v2169 = vpop.permute.xlu0 %2168
        %2171 = vst.msk [vmem:[%s228 + $0x8] sm:$0xff] %vm2127, %v2169
        %2172 = vrot.lane.b32.xlu0 %v2119, 108
        %v2173 = vpop.permute.xlu0 %2172
        %2175 = vst.msk [vmem:[%s228 + $0x8] sm:$0xff] %vm2132, %v2173
        %2176 = vrot.lane.b32.xlu0 %v2119, 106
        %v2177 = vpop.permute.xlu0 %2176
        %2179 = vst.msk [vmem:[%s228 + $0x8] sm:$0xff] %vm2137, %v2177
        %2180 = vrot.lane.b32.xlu0 %v2119, 104
        %v2181 = vpop.permute.xlu0 %2180
        %2183 = vst.msk [vmem:[%s228 + $0x8] sm:$0xff] %vm2142, %v2181
        %2184 = vrot.lane.b32.xlu0 %v2119, 102
        %v2185 = vpop.permute.xlu0 %2184
        %2187 = vst.msk [vmem:[%s228 + $0x8] sm:$0xff] %vm2147, %v2185
        %2189 = vrot.lane.b32.xlu0 %v2119, 100
        %v2190 = vpop.permute.xlu0 %2189
        %2191 = vrot.lane.b32.xlu0 %v2120, 100
        %v2192 = vpop.permute.xlu0 %2191
        %vm2193 = vcmask 818176
        %v2194 = vsel %vm2193, %v2190, %v2192
        %2196 = vst.msk [vmem:[%s228 + $0x8] sm:$0xff] %vm2152, %v2194
        %2197 = vrot.lane.b32.xlu0 %v2120, 98
        %v2198 = vpop.permute.xlu0 %2197
        %2200 = vst.msk [vmem:[%s228 + $0x8] sm:$0xff] %vm2162, %v2198
        %s2201 = sand.u32 %s120, 1
        %s2202 = scalar_lea.sflag [#allocation5], %s2201
        %s2203 = sand.u32 %s120, 1
        %s2204 = smul.addr %s2203, 16
        %s2205 = scalar_lea.vmem [#allocation6], %s2204
        // Predicated region
        $region37: #{tpu_custom_call.1} parent=31 // pred_check
          %p2206 = pneg %p130
        $region38: #{tpu_custom_call.1} parent=31 // pred_check_branch
          %2208 = sbr.rel (%p2206) target = $region40
        $region39: #{tpu_custom_call.1} parent=31 // pred_region
          %s2210 = ssub.s32 256, 256
          %2211 = vsyncadd %s2202, %s2210
          %s2212 = smul.addr %s25, 2
          %s2213 = smul.addr %s24, 2
          %s2214 = sadd.s32 %s2212, %s2213
          %s2215 = smul.addr %s2214, 128
          %s2216 = scalar_lea.hbm %s3, %s2215
          %s2218 = sshll.u32 %s2205, 4
          %s2219 = int_to_ptr.vmem [resolvable:$true] %s2218
          %2221 = dma.vmem_to_hbm [thread:$0]  %s2219, 256, %s2216, %s2202
        $region40: #{tpu_custom_call.1} parent=31 // pred_fallthru
          _
      $region32: #{tpu_custom_call.1} parent=5 // pred_fallthru
        _
      %p2222 = scmp.le.s32.totalorder 2, %s15
      // Predicated region
      $region41: #{tpu_custom_call.1} parent=5 // pred_check
        %p2223 = pneg %p2222
      $region42: #{tpu_custom_call.1} parent=5 // pred_check_branch
        %2225 = sbr.rel (%p2223) target = $region44
      $region43: #{tpu_custom_call.1} parent=5 // pred_region
        %s2226 = ssub.s32 %s15, 2
        // Predicated region
        $region45: #{tpu_custom_call.1} parent=43 // pred_check
          %p2227 = pneg %p136
        $region46: #{tpu_custom_call.1} parent=43 // pred_check_branch
          %2229 = sbr.rel (%p2227) target = $region48
        $region47: #{tpu_custom_call.1} parent=43 // pred_region
          %s2230 = sand.u32 %s121, 1
          %s2231 = scalar_lea.sflag [#allocation5], %s2230
          %s2232 = sand.u32 %s121, 1
          %s2233 = smul.addr %s2232, 16
          %s2234 = scalar_lea.vmem [#allocation6], %s2233
          %2235 = dma.done %s2231, 256
        $region48: #{tpu_custom_call.1} parent=43 // pred_fallthru
          _
      $region44: #{tpu_custom_call.1} parent=5 // pred_fallthru
        _
    $region6: #{tpu_custom_call.1} parent=1 // loop_footer
      %s19 = sadd.s32 1, %s15
    $region7: #{tpu_custom_call.1} parent=1 // loop_footer_branch
      %14 = sbr.rel target = $region3
    $region8: #{tpu_custom_call.1} parent=1 // loop_exit
      _
    %2236 = vsyncpa [#allocation4], 1
    %s2237 = scalar_lea.sflag [#allocation4], 1
    %2238 = vsyncpa %s2237, 1
    %2239 = vsyncpa [#allocation5], 1
    %s2240 = scalar_lea.sflag [#allocation5], 1
    %2241 = vsyncpa %s2240, 1

</llo_original>
